<compile_context>
chip_gen: v6e
topology: v6e:2x2x1
jax: 0.10.0
libtpu: 0.0.40
codegen_flags: <defaults>
</compile_context>

<pallas_src>
import functools

import jax
import jax.numpy as jnp
from jax.experimental import pallas as pl
from jax.experimental.pallas import tpu as pltpu


def _mhsa_intra_kernel(x_ref, seg_ref, wqkv_ref, bqkv_ref, wo_ref, bo_ref,
                       y_ref, o_ref, *, bt, t, heads, dim_head):
    """One grid step: `bt` batch items, full sequence length `t`.

    x_ref    : (bt, t, C)   matmul dtype (bf16), lane dim = C
    seg_ref  : (bt, 1, t)   int32 per-token segment ids (< 0 => fully masked)
    wqkv_ref : (C, 3C)      fused [Wq*scale | Wk | Wv]^T, matmul dtype
    bqkv_ref : (1, 3C)      fused [bq*scale | bk | bv], f32
    wo_ref   : (C, C)       Wo^T, matmul dtype
    bo_ref   : (1, C)       bo, f32
    y_ref    : (bt, t, C)   f32 output
    o_ref    : (bt*t, C)    f32 VMEM scratch (lane-dense attention output)
    """
    C = heads * dim_head
    mm_dtype = x_ref.dtype

    # Fused QKV projection: one (bt*t, C) @ (C, 3C) MXU pass, f32 accumulation.
    # Collapsing (bt, t, C) -> (bt*t, C) keeps the lane dim, so it is free.
    x2d = x_ref[...].reshape(bt * t, C)
    qkv = jnp.dot(x2d, wqkv_ref[...], preferred_element_type=jnp.float32)
    qkv = qkv + bqkv_ref[...]                                   # (bt*t, 3C) f32

    # Per (batch item, head) attention.  Heads are narrow (DH-wide) lane slices
    # of the 2-D qkv tile; outputs are written lane-dense into o_ref - no
    # (H, T, DH) rank-3 stacks and no per-head transposes.
    for b in range(bt):
        # Intra-segment validity mask rebuilt from per-token segment ids
        # (seg < 0 marks a fully masked token, reproducing the nan_to_num path).
        # f32 is exact for small integer ids and keeps the transpose on the
        # best-supported path.
        seg = seg_ref[b].astype(jnp.float32)                    # (1, t)
        seg_r = jnp.broadcast_to(seg, (t, t))                   # seg[j] at [i, j]
        seg_c = jnp.transpose(seg_r)                            # seg[i] at [i, j]
        valid = (seg_r == seg_c) & (seg_r >= 0.0)               # (t, t) bool
        row_has_valid = (jnp.sum(valid.astype(jnp.float32), axis=-1,
                                 keepdims=True) > 0.0)          # (t, 1)

        r0 = b * t
        for h in range(heads):
            c0 = h * dim_head
            q = qkv[r0:r0 + t, c0:c0 + dim_head].astype(mm_dtype)           # (t, DH)
            k = qkv[r0:r0 + t, C + c0:C + c0 + dim_head].astype(mm_dtype)
            v = qkv[r0:r0 + t, 2 * C + c0:2 * C + c0 + dim_head].astype(mm_dtype)

            # Attention scale already folded into Wq / bq.
            sim = jnp.einsum('td,sd->ts', q, k,
                             preferred_element_type=jnp.float32)            # (t, t)

            # Masked, numerically stable softmax (kept in f32 - safe on v5e).
            # Fully masked rows -> all-zero attention, matching
            # softmax(-inf row) -> NaN -> nan_to_num(0) in the reference.
            sim = jnp.where(valid, sim, -jnp.inf)
            row_max = jnp.max(sim, axis=-1, keepdims=True)
            row_max = jnp.where(row_has_valid, row_max, 0.0)
            p = jnp.exp(sim - row_max)                          # masked -> 0
            denom = jnp.sum(p, axis=-1, keepdims=True)
            denom = jnp.where(denom > 0.0, denom, 1.0)
            attn = p * pl.reciprocal(denom, approx=True)        # EUP slot

            out_h = jnp.dot(attn.astype(mm_dtype), v,
                            preferred_element_type=jnp.float32)             # (t, DH)
            o_ref[r0:r0 + t, c0:c0 + dim_head] = out_h

    # Output 1x1 conv: ONE (bt*t, C) @ (C, C) MXU matmul over the lane-dense
    # attention output (replaces the old per-head shallow-K accumulation loop).
    o2d = o_ref[...].astype(mm_dtype)
    y2d = jnp.dot(o2d, wo_ref[...], preferred_element_type=jnp.float32)
    y2d = y2d + bo_ref[...]
    y_ref[...] = y2d.reshape(bt, t, C)


def _choose_batch_tile(B, T):
    """Rows-per-grid-step batching: aim for ~128 rows of (rows, C) work per
    step, but keep at least 2 grid steps when B >= 2 so both v7x TensorCores
    stay busy.  Returns a divisor of B."""
    cap = max(1, 128 // max(T, 1))
    if B >= 2:
        cap = min(cap, B // 2)
    cap = max(1, min(cap, B))
    bt = 1
    for d in range(1, cap + 1):
        if B % d == 0:
            bt = d
    return bt


def _vmem_limit_bytes():
    """Generation-aware VMEM budget: v5e/v6e have 128 MiB physical (so raise
    the 16/32 MiB scoped default); v7x has only 64 MiB, leave headroom for the
    double-buffered activation blocks."""
    try:
        phys = int(pltpu.get_tpu_info().vmem_capacity_bytes)
    except Exception:
        return 32 * 1024 * 1024
    if phys <= 64 * 1024 * 1024:
        return 48 * 1024 * 1024          # v7x-class
    return 100 * 1024 * 1024             # v5e / v6e


def _build_call(*, B, T, C, bt, steps, kernel, single_buffer_weights):
    def const_spec(shape):
        # Constant-index operands: their block index never changes, so they do
        # not need double buffering.
        if single_buffer_weights:
            return pl.BlockSpec(shape, lambda i: (0,) * len(shape),
                                pipeline_mode=pl.Buffered(1))
        return pl.BlockSpec(shape, lambda i: (0,) * len(shape))

    return pl.pallas_call(
        kernel,
        out_shape=jax.ShapeDtypeStruct((B, T, C), jnp.float32),
        grid_spec=pltpu.PrefetchScalarGridSpec(
            num_scalar_prefetch=0,
            grid=(steps,),
            in_specs=[
                pl.BlockSpec((bt, T, C), lambda i: (i, 0, 0)),   # x (lane dim = C)
                pl.BlockSpec((bt, 1, T), lambda i: (i, 0, 0)),   # segment ids (row form)
                const_spec((C, 3 * C)),                          # fused QKV weight
                const_spec((1, 3 * C)),                          # fused QKV bias
                const_spec((C, C)),                              # out-conv weight
                const_spec((1, C)),                              # out-conv bias
            ],
            out_specs=pl.BlockSpec((bt, T, C), lambda i: (i, 0, 0)),
            scratch_shapes=[pltpu.VMEM((bt * T, C), jnp.float32)],
        ),
        compiler_params=pltpu.CompilerParams(
            dimension_semantics=("parallel",),
            vmem_limit_bytes=_vmem_limit_bytes()),
    )


def mhsa_intra_attention(x, intra_seg_ids, params, *, heads,
                         matmul_dtype=jnp.bfloat16):
    """Fused conv_q/k/v + intra-segment attention + conv_out.

    x: (B, C, T) float32.  intra_seg_ids: (B, T) int (negative = fully masked
    token, i.e. a row of the original (T, T) mask that is entirely zero).
    Returns conv_out(attention(x)) with shape (B, C, T), float32.
    """
    B, C, T = x.shape
    assert C % heads == 0
    dim_head = C // heads
    scale = float(dim_head) ** (-0.5)

    # Pack the three 1x1-conv projections into one (C, 3C) operand in the
    # x @ W^T orientation; fold the attention scale into Wq / bq.
    w_qkv_t = jnp.concatenate(
        [(params["wq"] * scale).T, params["wk"].T, params["wv"].T], axis=1)
    b_qkv = jnp.concatenate(
        [params["bq"] * scale, params["bk"], params["bv"]]).reshape(1, 3 * C)
    wo_t = params["wo"].T                                        # (C, C)
    bo = params["bo"].reshape(1, C)

    # NOTE: for T >= 128 it is cheaper to keep x as (B, C, T) and run the
    # projection in the W @ x orientation (T as the lane dim), saving this
    # extra HBM pass; at small T the (T, C) orientation is the right one.
    x_tc = jnp.transpose(x, (0, 2, 1)).astype(matmul_dtype)      # (B, T, C)
    seg = intra_seg_ids.astype(jnp.int32).reshape(B, 1, T)

    bt = _choose_batch_tile(B, T)
    steps = B // bt

    kernel = functools.partial(_mhsa_intra_kernel, bt=bt, t=T,
                               heads=heads, dim_head=dim_head)
    operands = (x_tc, seg,
                w_qkv_t.astype(matmul_dtype), b_qkv.astype(jnp.float32),
                wo_t.astype(matmul_dtype), bo.astype(jnp.float32))

    try:
        y_tc = _build_call(B=B, T=T, C=C, bt=bt, steps=steps, kernel=kernel,
                           single_buffer_weights=True)(*operands)
    except Exception:
        # Fallback for Pallas builds that reject Buffered(1) on these operands;
        # identical kernel, default (double-buffered) weight blocks.
        y_tc = _build_call(B=B, T=T, C=C, bt=bt, steps=steps, kernel=kernel,
                           single_buffer_weights=False)(*operands)

    return jnp.transpose(y_tc, (0, 2, 1))                        # back to (B, C, T)


def mhsa_intra_forward(x, intra_seg_ids, params, *, heads,
                       matmul_dtype=jnp.bfloat16):
    y = mhsa_intra_attention(x, intra_seg_ids, params, heads=heads,
                             matmul_dtype=matmul_dtype)
    # BatchNorm1d (training-mode batch statistics) + residual: cross-batch
    # reduction, kept as plain-JAX glue.  Per the module __init__ bn.weight and
    # bn.bias are zeroed so bn(y) == 0 and the output equals x exactly (the
    # stats below are then dead work; skip them if gamma/beta stay zero).
    B, C, T = x.shape
    mean = jnp.mean(y, axis=(0, 2), keepdims=True)
    var = jnp.mean((y - mean) ** 2, axis=(0, 2), keepdims=True)
    y_hat = (y - mean) * jax.lax.rsqrt(var + 1e-5)
    bn_out = (params["bn_gamma"].reshape(1, C, 1) * y_hat
              + params["bn_beta"].reshape(1, C, 1))
    return x + bn_out


def init_params(key, C):
    ks = jax.random.split(key, 8)
    s = 0.1
    return {
        "wq": jax.random.normal(ks[0], (C, C), jnp.float32) * s,
        "bq": jax.random.normal(ks[1], (C,), jnp.float32) * s,
        "wk": jax.random.normal(ks[2], (C, C), jnp.float32) * s,
        "bk": jax.random.normal(ks[3], (C,), jnp.float32) * s,
        "wv": jax.random.normal(ks[4], (C, C), jnp.float32) * s,
        "bv": jax.random.normal(ks[5], (C,), jnp.float32) * s,
        "wo": jax.random.normal(ks[6], (C, C), jnp.float32) * s,
        "bo": jax.random.normal(ks[7], (C,), jnp.float32) * s,
        # module __init__ zeroes bn weight/bias
        "bn_gamma": jnp.zeros((C,), jnp.float32),
        "bn_beta": jnp.zeros((C,), jnp.float32),
    }


def _reference_attention(x, seg_ids, params, heads, matmul_dtype):
    """Pure-JAX reference mirroring the PyTorch forward (pre-BN/residual),
    with the same bf16 matmul-input casts as the kernel."""
    B, C, T = x.shape
    dh = C // heads
    scale = float(dh) ** (-0.5)
    mm = matmul_dtype
    xm = x.astype(mm)

    def conv1x1(w, b):
        return (jnp.einsum('oc,bct->bot', w.astype(mm), xm,
                           preferred_element_type=jnp.float32)
                + b[None, :, None])

    q = conv1x1(params["wq"] * scale, params["bq"] * scale)
    k = conv1x1(params["wk"], params["bk"])
    v = conv1x1(params["wv"], params["bv"])
    q4 = q.reshape(B, heads, dh, T)
    k4 = k.reshape(B, heads, dh, T)
    v4 = v.reshape(B, heads, dh, T)

    valid = ((seg_ids[:, :, None] == seg_ids[:, None, :])
             & (seg_ids[:, :, None] >= 0) & (seg_ids[:, None, :] >= 0))

    sim = jnp.einsum('bhdq,bhdk->bhqk', q4.astype(mm), k4.astype(mm),
                     preferred_element_type=jnp.float32)
    sim = jnp.where(valid[:, None], sim, -jnp.inf)
    row_max = jnp.max(sim, axis=-1, keepdims=True)
    p = jnp.exp(sim - row_max)                     # fully-masked rows -> NaN
    attn = p / jnp.sum(p, axis=-1, keepdims=True)
    attn = jnp.nan_to_num(attn, nan=0.0)           # torch.nan_to_num
    out = jnp.einsum('bhqk,bhdk->bhdq', attn.astype(mm), v4.astype(mm),
                     preferred_element_type=jnp.float32)
    o = out.reshape(B, C, T)
    y = (jnp.einsum('oc,bct->bot', params["wo"].astype(mm), o.astype(mm),
                    preferred_element_type=jnp.float32)
         + params["bo"][None, :, None])
    return y


if __name__ == "__main__":
    B, C, T, HEADS = 2, 32, 16, 4   # dim_in=32, heads=4 -> dim_head=8; num_pos=T

    key = jax.random.PRNGKey(0)
    kx, kp = jax.random.split(key)
    x = jax.random.normal(kx, (B, C, T), jnp.float32)

    # Two segments of length T//2; token 3 fully masked (seg id -1) to
    # exercise the nan_to_num (all-masked-row) path.
    seg = (jnp.arange(T) // (T // 2)).astype(jnp.int32)
    seg = seg.at[3].set(-1)
    seg_ids = jnp.broadcast_to(seg, (B, T))

    params = init_params(kp, C)

    y_kernel = jax.block_until_ready(
        mhsa_intra_attention(x, seg_ids, params, heads=HEADS))
    y_ref = _reference_attention(x, seg_ids, params, HEADS, jnp.bfloat16)

    assert y_kernel.shape == (B, C, T)
    assert bool(jnp.all(jnp.isfinite(y_kernel)))
    assert bool(jnp.allclose(y_kernel, y_ref, atol=2e-2, rtol=2e-2))

    out = jax.block_until_ready(
        mhsa_intra_forward(x, seg_ids, params, heads=HEADS))
    assert out.shape == (B, C, T) and out.dtype == jnp.float32
    assert bool(jnp.all(jnp.isfinite(out)))
    print("KERNEL_OK")
</pallas_src>

<mosaic_0001>
module attributes {stable_mosaic.version = 11 : i64} {
  func.func @_mhsa_intra_kernel(%arg0: i32, %arg1: memref<1x16x32xbf16, #tpu.memory_space<vmem>>, %arg2: memref<1x1x16xi32, #tpu.memory_space<vmem>>, %arg3: memref<32x96xbf16, #tpu.memory_space<vmem>>, %arg4: memref<1x96xf32, #tpu.memory_space<vmem>>, %arg5: memref<32x32xbf16, #tpu.memory_space<vmem>>, %arg6: memref<1x32xf32, #tpu.memory_space<vmem>>, %arg7: memref<1x16x32xf32, #tpu.memory_space<vmem>>, %arg8: memref<16x32xf32, #tpu.memory_space<vmem>>) attributes {dimension_semantics = [#tpu.dimension_semantics<parallel>], iteration_bounds = array<i64: 2>, scalar_prefetch = 0 : i64, scratch_operands = 1 : i64, tpu.core_type = #tpu.core_type<tc>, window_params = [{transform_indices = @transform_0, window_bounds = array<i64: 1, 16, 32>}, {transform_indices = @transform_1, window_bounds = array<i64: 1, 1, 16>}, {pipeline_mode = #tpu.pipeline_mode<synchronous>, transform_indices = @transform_2, window_bounds = array<i64: 32, 96>}, {pipeline_mode = #tpu.pipeline_mode<synchronous>, transform_indices = @transform_3, window_bounds = array<i64: 1, 96>}, {pipeline_mode = #tpu.pipeline_mode<synchronous>, transform_indices = @transform_4, window_bounds = array<i64: 32, 32>}, {pipeline_mode = #tpu.pipeline_mode<synchronous>, transform_indices = @transform_5, window_bounds = array<i64: 1, 32>}, {transform_indices = @transform_6, window_bounds = array<i64: 1, 16, 32>}]} {
    %c0 = arith.constant 0 : index
    %c0_0 = arith.constant 0 : index
    %c0_1 = arith.constant 0 : index
    %0 = vector.load %arg1[%c0, %c0_0, %c0_1] : memref<1x16x32xbf16, #tpu.memory_space<vmem>>, vector<1x16x32xbf16>
    %1 = vector.shape_cast %0 : vector<1x16x32xbf16> to vector<16x32xbf16>
    %c0_2 = arith.constant 0 : index
    %c0_3 = arith.constant 0 : index
    %2 = vector.load %arg3[%c0_2, %c0_3] : memref<32x96xbf16, #tpu.memory_space<vmem>>, vector<32x96xbf16>
    %cst = arith.constant dense<0.000000e+00> : vector<16x96xf32>
    %3 = tpu.matmul %1, %2, %cst {dimension_numbers = #tpu.dot_dimension_numbers<[1], [0], [0], [1], [0, 0, 1, 1], [], []>} : vector<16x32xbf16>, vector<32x96xbf16>, vector<16x96xf32> -> vector<16x96xf32>
    %c0_4 = arith.constant 0 : index
    %c0_5 = arith.constant 0 : index
    %4 = vector.load %arg4[%c0_4, %c0_5] : memref<1x96xf32, #tpu.memory_space<vmem>>, vector<1x96xf32>
    %5 = vector.broadcast %4 : vector<1x96xf32> to vector<16x96xf32>
    %6 = arith.addf %3, %5 : vector<16x96xf32>
    %c0_6 = arith.constant 0 : index
    %c0_7 = arith.constant 0 : index
    %c0_8 = arith.constant 0 : index
    %7 = vector.load %arg2[%c0_6, %c0_7, %c0_8] : memref<1x1x16xi32, #tpu.memory_space<vmem>>, vector<1x1x16xi32>
    %8 = vector.shape_cast %7 : vector<1x1x16xi32> to vector<1x16xi32>
    %9 = arith.sitofp %8 : vector<1x16xi32> to vector<1x16xf32>
    %10 = vector.shape_cast %9 : vector<1x16xf32> to vector<1x16xf32>
    %11 = vector.broadcast %10 : vector<1x16xf32> to vector<16x16xf32>
    %12 = tpu.transpose %11, [1, 0] : vector<16x16xf32> -> vector<16x16xf32>
    %13 = arith.cmpf oeq, %11, %12 : vector<16x16xf32>
    %cst_9 = arith.constant 0.000000e+00 : f32
    %14 = vector.broadcast %cst_9 : f32 to vector<16x16xf32>
    %15 = arith.cmpf oge, %11, %14 : vector<16x16xf32>
    %16 = arith.andi %13, %15 : vector<16x16xi1>
    %17 = arith.extui %16 : vector<16x16xi1> to vector<16x16xi32>
    %18 = arith.sitofp %17 : vector<16x16xi32> to vector<16x16xf32>
    %cst_10 = arith.constant dense<0.000000e+00> : vector<16xf32>
    %19 = vector.multi_reduction <add>, %18, %cst_10 [1] : vector<16x16xf32> to vector<16xf32>
    %20 = vector.shape_cast %19 : vector<16xf32> to vector<16x1xf32>
    %cst_11 = arith.constant 0.000000e+00 : f32
    %21 = vector.broadcast %cst_11 : f32 to vector<16x1xf32>
    %22 = arith.cmpf ogt, %20, %21 : vector<16x1xf32>
    %23 = vector.extract_strided_slice %6 {offsets = [0, 0], sizes = [16, 8], strides = [1, 1]} : vector<16x96xf32> to vector<16x8xf32>
    %24 = arith.truncf %23 : vector<16x8xf32> to vector<16x8xbf16>
    %25 = vector.extract_strided_slice %6 {offsets = [0, 32], sizes = [16, 8], strides = [1, 1]} : vector<16x96xf32> to vector<16x8xf32>
    %26 = arith.truncf %25 : vector<16x8xf32> to vector<16x8xbf16>
    %27 = vector.extract_strided_slice %6 {offsets = [0, 64], sizes = [16, 8], strides = [1, 1]} : vector<16x96xf32> to vector<16x8xf32>
    %28 = arith.truncf %27 : vector<16x8xf32> to vector<16x8xbf16>
    "tpu.trace_start"() <{level = 10 : i32, message = "td,sd->ts"}> : () -> ()
    %cst_12 = arith.constant dense<0.000000e+00> : vector<16x16xf32>
    %29 = tpu.matmul %24, %26, %cst_12 {dimension_numbers = #tpu.dot_dimension_numbers<[1], [1], [0], [0], [0, 0, 1, 0], [], []>} : vector<16x8xbf16>, vector<16x8xbf16>, vector<16x16xf32> -> vector<16x16xf32>
    %cst_13 = arith.constant 0xFF800000 : f32
    "tpu.trace_stop"() : () -> ()
    %30 = vector.broadcast %cst_13 : f32 to vector<16x16xf32>
    %31 = arith.select %16, %29, %30 : vector<16x16xi1>, vector<16x16xf32>
    %cst_14 = arith.constant dense<0xFF800000> : vector<16xf32>
    %32 = vector.multi_reduction <maximumf>, %31, %cst_14 [1] : vector<16x16xf32> to vector<16xf32>
    %33 = vector.shape_cast %32 : vector<16xf32> to vector<16x1xf32>
    %cst_15 = arith.constant 0.000000e+00 : f32
    %34 = vector.broadcast %cst_15 : f32 to vector<16x1xf32>
    %35 = arith.select %22, %33, %34 : vector<16x1xi1>, vector<16x1xf32>
    %36 = vector.broadcast %35 : vector<16x1xf32> to vector<16x16xf32>
    %37 = arith.subf %31, %36 : vector<16x16xf32>
    %38 = math.exp %37 : vector<16x16xf32>
    %cst_16 = arith.constant dense<0.000000e+00> : vector<16xf32>
    %39 = vector.multi_reduction <add>, %38, %cst_16 [1] : vector<16x16xf32> to vector<16xf32>
    %40 = vector.shape_cast %39 : vector<16xf32> to vector<16x1xf32>
    %cst_17 = arith.constant 0.000000e+00 : f32
    %41 = vector.broadcast %cst_17 : f32 to vector<16x1xf32>
    %42 = arith.cmpf ogt, %40, %41 : vector<16x1xf32>
    %cst_18 = arith.constant 1.000000e+00 : f32
    %43 = vector.broadcast %cst_18 : f32 to vector<16x1xf32>
    %44 = arith.select %42, %40, %43 : vector<16x1xi1>, vector<16x1xf32>
    %45 = tpu.reciprocal %44 {approx = true} : vector<16x1xf32> -> vector<16x1xf32>
    %46 = vector.broadcast %45 : vector<16x1xf32> to vector<16x16xf32>
    %47 = arith.mulf %38, %46 : vector<16x16xf32>
    %48 = arith.truncf %47 : vector<16x16xf32> to vector<16x16xbf16>
    %cst_19 = arith.constant dense<0.000000e+00> : vector<16x8xf32>
    %49 = tpu.matmul %48, %28, %cst_19 {dimension_numbers = #tpu.dot_dimension_numbers<[1], [0], [0], [1], [0, 0, 1, 1], [], []>} : vector<16x16xbf16>, vector<16x8xbf16>, vector<16x8xf32> -> vector<16x8xf32>
    %c0_20 = arith.constant 0 : index
    %c0_21 = arith.constant 0 : index
    %50 = vector.load %arg8[%c0_20, %c0_21] : memref<16x32xf32, #tpu.memory_space<vmem>>, vector<16x8xf32>
    tpu.vector_store %arg8[%c0_20, %c0_21], %49 {strides = array<i32>} : memref<16x32xf32, #tpu.memory_space<vmem>>, vector<16x8xf32>,
    %51 = vector.extract_strided_slice %6 {offsets = [0, 8], sizes = [16, 8], strides = [1, 1]} : vector<16x96xf32> to vector<16x8xf32>
    %52 = arith.truncf %51 : vector<16x8xf32> to vector<16x8xbf16>
    %53 = vector.extract_strided_slice %6 {offsets = [0, 40], sizes = [16, 8], strides = [1, 1]} : vector<16x96xf32> to vector<16x8xf32>
    %54 = arith.truncf %53 : vector<16x8xf32> to vector<16x8xbf16>
    %55 = vector.extract_strided_slice %6 {offsets = [0, 72], sizes = [16, 8], strides = [1, 1]} : vector<16x96xf32> to vector<16x8xf32>
    %56 = arith.truncf %55 : vector<16x8xf32> to vector<16x8xbf16>
    "tpu.trace_start"() <{level = 10 : i32, message = "td,sd->ts"}> : () -> ()
    %cst_22 = arith.constant dense<0.000000e+00> : vector<16x16xf32>
    %57 = tpu.matmul %52, %54, %cst_22 {dimension_numbers = #tpu.dot_dimension_numbers<[1], [1], [0], [0], [0, 0, 1, 0], [], []>} : vector<16x8xbf16>, vector<16x8xbf16>, vector<16x16xf32> -> vector<16x16xf32>
    %cst_23 = arith.constant 0xFF800000 : f32
    "tpu.trace_stop"() : () -> ()
    %58 = vector.broadcast %cst_23 : f32 to vector<16x16xf32>
    %59 = arith.select %16, %57, %58 : vector<16x16xi1>, vector<16x16xf32>
    %cst_24 = arith.constant dense<0xFF800000> : vector<16xf32>
    %60 = vector.multi_reduction <maximumf>, %59, %cst_24 [1] : vector<16x16xf32> to vector<16xf32>
    %61 = vector.shape_cast %60 : vector<16xf32> to vector<16x1xf32>
    %cst_25 = arith.constant 0.000000e+00 : f32
    %62 = vector.broadcast %cst_25 : f32 to vector<16x1xf32>
    %63 = arith.select %22, %61, %62 : vector<16x1xi1>, vector<16x1xf32>
    %64 = vector.broadcast %63 : vector<16x1xf32> to vector<16x16xf32>
    %65 = arith.subf %59, %64 : vector<16x16xf32>
    %66 = math.exp %65 : vector<16x16xf32>
    %cst_26 = arith.constant dense<0.000000e+00> : vector<16xf32>
    %67 = vector.multi_reduction <add>, %66, %cst_26 [1] : vector<16x16xf32> to vector<16xf32>
    %68 = vector.shape_cast %67 : vector<16xf32> to vector<16x1xf32>
    %cst_27 = arith.constant 0.000000e+00 : f32
    %69 = vector.broadcast %cst_27 : f32 to vector<16x1xf32>
    %70 = arith.cmpf ogt, %68, %69 : vector<16x1xf32>
    %cst_28 = arith.constant 1.000000e+00 : f32
    %71 = vector.broadcast %cst_28 : f32 to vector<16x1xf32>
    %72 = arith.select %70, %68, %71 : vector<16x1xi1>, vector<16x1xf32>
    %73 = tpu.reciprocal %72 {approx = true} : vector<16x1xf32> -> vector<16x1xf32>
    %74 = vector.broadcast %73 : vector<16x1xf32> to vector<16x16xf32>
    %75 = arith.mulf %66, %74 : vector<16x16xf32>
    %76 = arith.truncf %75 : vector<16x16xf32> to vector<16x16xbf16>
    %cst_29 = arith.constant dense<0.000000e+00> : vector<16x8xf32>
    %77 = tpu.matmul %76, %56, %cst_29 {dimension_numbers = #tpu.dot_dimension_numbers<[1], [0], [0], [1], [0, 0, 1, 1], [], []>} : vector<16x16xbf16>, vector<16x8xbf16>, vector<16x8xf32> -> vector<16x8xf32>
    %c0_30 = arith.constant 0 : index
    %c8 = arith.constant 8 : index
    %78 = vector.load %arg8[%c0_30, %c8] : memref<16x32xf32, #tpu.memory_space<vmem>>, vector<16x8xf32>
    tpu.vector_store %arg8[%c0_30, %c8], %77 {strides = array<i32>} : memref<16x32xf32, #tpu.memory_space<vmem>>, vector<16x8xf32>,
    %79 = vector.extract_strided_slice %6 {offsets = [0, 16], sizes = [16, 8], strides = [1, 1]} : vector<16x96xf32> to vector<16x8xf32>
    %80 = arith.truncf %79 : vector<16x8xf32> to vector<16x8xbf16>
    %81 = vector.extract_strided_slice %6 {offsets = [0, 48], sizes = [16, 8], strides = [1, 1]} : vector<16x96xf32> to vector<16x8xf32>
    %82 = arith.truncf %81 : vector<16x8xf32> to vector<16x8xbf16>
    %83 = vector.extract_strided_slice %6 {offsets = [0, 80], sizes = [16, 8], strides = [1, 1]} : vector<16x96xf32> to vector<16x8xf32>
    %84 = arith.truncf %83 : vector<16x8xf32> to vector<16x8xbf16>
    "tpu.trace_start"() <{level = 10 : i32, message = "td,sd->ts"}> : () -> ()
    %cst_31 = arith.constant dense<0.000000e+00> : vector<16x16xf32>
    %85 = tpu.matmul %80, %82, %cst_31 {dimension_numbers = #tpu.dot_dimension_numbers<[1], [1], [0], [0], [0, 0, 1, 0], [], []>} : vector<16x8xbf16>, vector<16x8xbf16>, vector<16x16xf32> -> vector<16x16xf32>
    %cst_32 = arith.constant 0xFF800000 : f32
    "tpu.trace_stop"() : () -> ()
    %86 = vector.broadcast %cst_32 : f32 to vector<16x16xf32>
    %87 = arith.select %16, %85, %86 : vector<16x16xi1>, vector<16x16xf32>
    %cst_33 = arith.constant dense<0xFF800000> : vector<16xf32>
    %88 = vector.multi_reduction <maximumf>, %87, %cst_33 [1] : vector<16x16xf32> to vector<16xf32>
    %89 = vector.shape_cast %88 : vector<16xf32> to vector<16x1xf32>
    %cst_34 = arith.constant 0.000000e+00 : f32
    %90 = vector.broadcast %cst_34 : f32 to vector<16x1xf32>
    %91 = arith.select %22, %89, %90 : vector<16x1xi1>, vector<16x1xf32>
    %92 = vector.broadcast %91 : vector<16x1xf32> to vector<16x16xf32>
    %93 = arith.subf %87, %92 : vector<16x16xf32>
    %94 = math.exp %93 : vector<16x16xf32>
    %cst_35 = arith.constant dense<0.000000e+00> : vector<16xf32>
    %95 = vector.multi_reduction <add>, %94, %cst_35 [1] : vector<16x16xf32> to vector<16xf32>
    %96 = vector.shape_cast %95 : vector<16xf32> to vector<16x1xf32>
    %cst_36 = arith.constant 0.000000e+00 : f32
    %97 = vector.broadcast %cst_36 : f32 to vector<16x1xf32>
    %98 = arith.cmpf ogt, %96, %97 : vector<16x1xf32>
    %cst_37 = arith.constant 1.000000e+00 : f32
    %99 = vector.broadcast %cst_37 : f32 to vector<16x1xf32>
    %100 = arith.select %98, %96, %99 : vector<16x1xi1>, vector<16x1xf32>
    %101 = tpu.reciprocal %100 {approx = true} : vector<16x1xf32> -> vector<16x1xf32>
    %102 = vector.broadcast %101 : vector<16x1xf32> to vector<16x16xf32>
    %103 = arith.mulf %94, %102 : vector<16x16xf32>
    %104 = arith.truncf %103 : vector<16x16xf32> to vector<16x16xbf16>
    %cst_38 = arith.constant dense<0.000000e+00> : vector<16x8xf32>
    %105 = tpu.matmul %104, %84, %cst_38 {dimension_numbers = #tpu.dot_dimension_numbers<[1], [0], [0], [1], [0, 0, 1, 1], [], []>} : vector<16x16xbf16>, vector<16x8xbf16>, vector<16x8xf32> -> vector<16x8xf32>
    %c0_39 = arith.constant 0 : index
    %c16 = arith.constant 16 : index
    %106 = vector.load %arg8[%c0_39, %c16] : memref<16x32xf32, #tpu.memory_space<vmem>>, vector<16x8xf32>
    tpu.vector_store %arg8[%c0_39, %c16], %105 {strides = array<i32>} : memref<16x32xf32, #tpu.memory_space<vmem>>, vector<16x8xf32>,
    %107 = vector.extract_strided_slice %6 {offsets = [0, 24], sizes = [16, 8], strides = [1, 1]} : vector<16x96xf32> to vector<16x8xf32>
    %108 = arith.truncf %107 : vector<16x8xf32> to vector<16x8xbf16>
    %109 = vector.extract_strided_slice %6 {offsets = [0, 56], sizes = [16, 8], strides = [1, 1]} : vector<16x96xf32> to vector<16x8xf32>
    %110 = arith.truncf %109 : vector<16x8xf32> to vector<16x8xbf16>
    %111 = vector.extract_strided_slice %6 {offsets = [0, 88], sizes = [16, 8], strides = [1, 1]} : vector<16x96xf32> to vector<16x8xf32>
    %112 = arith.truncf %111 : vector<16x8xf32> to vector<16x8xbf16>
    "tpu.trace_start"() <{level = 10 : i32, message = "td,sd->ts"}> : () -> ()
    %cst_40 = arith.constant dense<0.000000e+00> : vector<16x16xf32>
    %113 = tpu.matmul %108, %110, %cst_40 {dimension_numbers = #tpu.dot_dimension_numbers<[1], [1], [0], [0], [0, 0, 1, 0], [], []>} : vector<16x8xbf16>, vector<16x8xbf16>, vector<16x16xf32> -> vector<16x16xf32>
    %cst_41 = arith.constant 0xFF800000 : f32
    "tpu.trace_stop"() : () -> ()
    %114 = vector.broadcast %cst_41 : f32 to vector<16x16xf32>
    %115 = arith.select %16, %113, %114 : vector<16x16xi1>, vector<16x16xf32>
    %cst_42 = arith.constant dense<0xFF800000> : vector<16xf32>
    %116 = vector.multi_reduction <maximumf>, %115, %cst_42 [1] : vector<16x16xf32> to vector<16xf32>
    %117 = vector.shape_cast %116 : vector<16xf32> to vector<16x1xf32>
    %cst_43 = arith.constant 0.000000e+00 : f32
    %118 = vector.broadcast %cst_43 : f32 to vector<16x1xf32>
    %119 = arith.select %22, %117, %118 : vector<16x1xi1>, vector<16x1xf32>
    %120 = vector.broadcast %119 : vector<16x1xf32> to vector<16x16xf32>
    %121 = arith.subf %115, %120 : vector<16x16xf32>
    %122 = math.exp %121 : vector<16x16xf32>
    %cst_44 = arith.constant dense<0.000000e+00> : vector<16xf32>
    %123 = vector.multi_reduction <add>, %122, %cst_44 [1] : vector<16x16xf32> to vector<16xf32>
    %124 = vector.shape_cast %123 : vector<16xf32> to vector<16x1xf32>
    %cst_45 = arith.constant 0.000000e+00 : f32
    %125 = vector.broadcast %cst_45 : f32 to vector<16x1xf32>
    %126 = arith.cmpf ogt, %124, %125 : vector<16x1xf32>
    %cst_46 = arith.constant 1.000000e+00 : f32
    %127 = vector.broadcast %cst_46 : f32 to vector<16x1xf32>
    %128 = arith.select %126, %124, %127 : vector<16x1xi1>, vector<16x1xf32>
    %129 = tpu.reciprocal %128 {approx = true} : vector<16x1xf32> -> vector<16x1xf32>
    %130 = vector.broadcast %129 : vector<16x1xf32> to vector<16x16xf32>
    %131 = arith.mulf %122, %130 : vector<16x16xf32>
    %132 = arith.truncf %131 : vector<16x16xf32> to vector<16x16xbf16>
    %cst_47 = arith.constant dense<0.000000e+00> : vector<16x8xf32>
    %133 = tpu.matmul %132, %112, %cst_47 {dimension_numbers = #tpu.dot_dimension_numbers<[1], [0], [0], [1], [0, 0, 1, 1], [], []>} : vector<16x16xbf16>, vector<16x8xbf16>, vector<16x8xf32> -> vector<16x8xf32>
    %c0_48 = arith.constant 0 : index
    %c24 = arith.constant 24 : index
    %134 = vector.load %arg8[%c0_48, %c24] : memref<16x32xf32, #tpu.memory_space<vmem>>, vector<16x8xf32>
    tpu.vector_store %arg8[%c0_48, %c24], %133 {strides = array<i32>} : memref<16x32xf32, #tpu.memory_space<vmem>>, vector<16x8xf32>,
    %c0_49 = arith.constant 0 : index
    %c0_50 = arith.constant 0 : index
    %135 = vector.load %arg8[%c0_49, %c0_50] : memref<16x32xf32, #tpu.memory_space<vmem>>, vector<16x32xf32>
    %136 = arith.truncf %135 : vector<16x32xf32> to vector<16x32xbf16>
    %c0_51 = arith.constant 0 : index
    %c0_52 = arith.constant 0 : index
    %137 = vector.load %arg5[%c0_51, %c0_52] : memref<32x32xbf16, #tpu.memory_space<vmem>>, vector<32x32xbf16>
    %cst_53 = arith.constant dense<0.000000e+00> : vector<16x32xf32>
    %138 = tpu.matmul %136, %137, %cst_53 {dimension_numbers = #tpu.dot_dimension_numbers<[1], [0], [0], [1], [0, 0, 1, 1], [], []>} : vector<16x32xbf16>, vector<32x32xbf16>, vector<16x32xf32> -> vector<16x32xf32>
    %c0_54 = arith.constant 0 : index
    %c0_55 = arith.constant 0 : index
    %139 = vector.load %arg6[%c0_54, %c0_55] : memref<1x32xf32, #tpu.memory_space<vmem>>, vector<1x32xf32>
    %140 = vector.broadcast %139 : vector<1x32xf32> to vector<16x32xf32>
    %141 = arith.addf %138, %140 : vector<16x32xf32>
    %142 = vector.shape_cast %141 : vector<16x32xf32> to vector<1x16x32xf32>
    %c0_56 = arith.constant 0 : index
    %c0_57 = arith.constant 0 : index
    %c0_58 = arith.constant 0 : index
    %143 = vector.load %arg7[%c0_56, %c0_57, %c0_58] : memref<1x16x32xf32, #tpu.memory_space<vmem>>, vector<1x16x32xf32>
    tpu.vector_store %arg7[%c0_56, %c0_57, %c0_58], %142 {strides = array<i32>} : memref<1x16x32xf32, #tpu.memory_space<vmem>>, vector<1x16x32xf32>,
    return
  }
  func.func @transform_0(%arg0: i32) -> (i32, i32, i32) {
    %c0_i32 = arith.constant 0 : i32
    %c0_i32_0 = arith.constant 0 : i32
    %c0_i32_1 = arith.constant 0 : i32
    return %arg0, %c0_i32, %c0_i32_0 : i32, i32, i32
  }
  func.func @transform_1(%arg0: i32) -> (i32, i32, i32) {
    %c0_i32 = arith.constant 0 : i32
    %c0_i32_0 = arith.constant 0 : i32
    %c0_i32_1 = arith.constant 0 : i32
    return %arg0, %c0_i32, %c0_i32_0 : i32, i32, i32
  }
  func.func @transform_2(%arg0: i32) -> (i32, i32) {
    %c0_i32 = arith.constant 0 : i32
    %c0_i32_0 = arith.constant 0 : i32
    %c0_i32_1 = arith.constant 0 : i32
    return %c0_i32, %c0_i32_0 : i32, i32
  }
  func.func @transform_3(%arg0: i32) -> (i32, i32) {
    %c0_i32 = arith.constant 0 : i32
    %c0_i32_0 = arith.constant 0 : i32
    %c0_i32_1 = arith.constant 0 : i32
    return %c0_i32, %c0_i32_0 : i32, i32
  }
  func.func @transform_4(%arg0: i32) -> (i32, i32) {
    %c0_i32 = arith.constant 0 : i32
    %c0_i32_0 = arith.constant 0 : i32
    %c0_i32_1 = arith.constant 0 : i32
    return %c0_i32, %c0_i32_0 : i32, i32
  }
  func.func @transform_5(%arg0: i32) -> (i32, i32) {
    %c0_i32 = arith.constant 0 : i32
    %c0_i32_0 = arith.constant 0 : i32
    %c0_i32_1 = arith.constant 0 : i32
    return %c0_i32, %c0_i32_0 : i32, i32
  }
  func.func @transform_6(%arg0: i32) -> (i32, i32, i32) {
    %c0_i32 = arith.constant 0 : i32
    %c0_i32_0 = arith.constant 0 : i32
    %c0_i32_1 = arith.constant 0 : i32
    return %arg0, %c0_i32, %c0_i32_0 : i32, i32, i32
  }
}

module attributes {stable_mosaic.version = 11 : i64} {
  func.func @_mhsa_intra_kernel(%arg0: i32, %arg1: memref<1x16x32xbf16, #tpu.memory_space<vmem>>, %arg2: memref<1x1x16xi32, #tpu.memory_space<vmem>>, %arg3: memref<32x96xbf16, #tpu.memory_space<vmem>>, %arg4: memref<1x96xf32, #tpu.memory_space<vmem>>, %arg5: memref<32x32xbf16, #tpu.memory_space<vmem>>, %arg6: memref<1x32xf32, #tpu.memory_space<vmem>>, %arg7: memref<1x16x32xf32, #tpu.memory_space<vmem>>, %arg8: memref<16x32xf32, #tpu.memory_space<vmem>>) attributes {dimension_semantics = [#tpu.dimension_semantics<parallel>], iteration_bounds = array<i64: 2>, scalar_prefetch = 0 : i64, scratch_operands = 1 : i64, tpu.core_type = #tpu.core_type<tc>, window_params = [{transform_indices = @transform_0, window_bounds = array<i64: 1, 16, 32>}, {transform_indices = @transform_1, window_bounds = array<i64: 1, 1, 16>}, {pipeline_mode = #tpu.pipeline_mode<synchronous>, transform_indices = @transform_2, window_bounds = array<i64: 32, 96>}, {pipeline_mode = #tpu.pipeline_mode<synchronous>, transform_indices = @transform_3, window_bounds = array<i64: 1, 96>}, {pipeline_mode = #tpu.pipeline_mode<synchronous>, transform_indices = @transform_4, window_bounds = array<i64: 32, 32>}, {pipeline_mode = #tpu.pipeline_mode<synchronous>, transform_indices = @transform_5, window_bounds = array<i64: 1, 32>}, {transform_indices = @transform_6, window_bounds = array<i64: 1, 16, 32>}]} {
    %c0 = arith.constant 0 : index
    %c0_0 = arith.constant 0 : index
    %c0_1 = arith.constant 0 : index
    %0 = vector.load %arg1[%c0, %c0_0, %c0_1] : memref<1x16x32xbf16, #tpu.memory_space<vmem>>, vector<1x16x32xbf16>
    %1 = vector.shape_cast %0 : vector<1x16x32xbf16> to vector<16x32xbf16>
    %c0_2 = arith.constant 0 : index
    %c0_3 = arith.constant 0 : index
    %2 = vector.load %arg3[%c0_2, %c0_3] : memref<32x96xbf16, #tpu.memory_space<vmem>>, vector<32x96xbf16>
    %cst = arith.constant dense<0.000000e+00> : vector<16x96xf32>
    %3 = tpu.matmul %1, %2, %cst {dimension_numbers = #tpu.dot_dimension_numbers<[1], [0], [0], [1], [0, 0, 1, 1], [], []>} : vector<16x32xbf16>, vector<32x96xbf16>, vector<16x96xf32> -> vector<16x96xf32>
    %c0_4 = arith.constant 0 : index
    %c0_5 = arith.constant 0 : index
    %4 = vector.load %arg4[%c0_4, %c0_5] : memref<1x96xf32, #tpu.memory_space<vmem>>, vector<1x96xf32>
    %5 = vector.broadcast %4 : vector<1x96xf32> to vector<16x96xf32>
    %6 = arith.addf %3, %5 : vector<16x96xf32>
    %c0_6 = arith.constant 0 : index
    %c0_7 = arith.constant 0 : index
    %c0_8 = arith.constant 0 : index
    %7 = vector.load %arg2[%c0_6, %c0_7, %c0_8] : memref<1x1x16xi32, #tpu.memory_space<vmem>>, vector<1x1x16xi32>
    %8 = vector.shape_cast %7 : vector<1x1x16xi32> to vector<1x16xi32>
    %9 = arith.sitofp %8 : vector<1x16xi32> to vector<1x16xf32>
    %10 = vector.shape_cast %9 : vector<1x16xf32> to vector<1x16xf32>
    %11 = vector.broadcast %10 : vector<1x16xf32> to vector<16x16xf32>
    %12 = tpu.transpose %11, [1, 0] : vector<16x16xf32> -> vector<16x16xf32>
    %13 = arith.cmpf oeq, %11, %12 : vector<16x16xf32>
    %cst_9 = arith.constant 0.000000e+00 : f32
    %14 = vector.broadcast %cst_9 : f32 to vector<16x16xf32>
    %15 = arith.cmpf oge, %11, %14 : vector<16x16xf32>
    %16 = arith.andi %13, %15 : vector<16x16xi1>
    %17 = arith.extui %16 : vector<16x16xi1> to vector<16x16xi32>
    %18 = arith.sitofp %17 : vector<16x16xi32> to vector<16x16xf32>
    %cst_10 = arith.constant dense<0.000000e+00> : vector<16xf32>
    %19 = vector.multi_reduction <add>, %18, %cst_10 [1] : vector<16x16xf32> to vector<16xf32>
    %20 = vector.shape_cast %19 : vector<16xf32> to vector<16x1xf32>
    %cst_11 = arith.constant 0.000000e+00 : f32
    %21 = vector.broadcast %cst_11 : f32 to vector<16x1xf32>
    %22 = arith.cmpf ogt, %20, %21 : vector<16x1xf32>
    %23 = vector.extract_strided_slice %6 {offsets = [0, 0], sizes = [16, 8], strides = [1, 1]} : vector<16x96xf32> to vector<16x8xf32>
    %24 = arith.truncf %23 : vector<16x8xf32> to vector<16x8xbf16>
    %25 = vector.extract_strided_slice %6 {offsets = [0, 32], sizes = [16, 8], strides = [1, 1]} : vector<16x96xf32> to vector<16x8xf32>
    %26 = arith.truncf %25 : vector<16x8xf32> to vector<16x8xbf16>
    %27 = vector.extract_strided_slice %6 {offsets = [0, 64], sizes = [16, 8], strides = [1, 1]} : vector<16x96xf32> to vector<16x8xf32>
    %28 = arith.truncf %27 : vector<16x8xf32> to vector<16x8xbf16>
    "tpu.trace_start"() <{level = 10 : i32, message = "td,sd->ts"}> : () -> ()
    %cst_12 = arith.constant dense<0.000000e+00> : vector<16x16xf32>
    %29 = tpu.matmul %24, %26, %cst_12 {dimension_numbers = #tpu.dot_dimension_numbers<[1], [1], [0], [0], [0, 0, 1, 0], [], []>} : vector<16x8xbf16>, vector<16x8xbf16>, vector<16x16xf32> -> vector<16x16xf32>
    %cst_13 = arith.constant 0xFF800000 : f32
    "tpu.trace_stop"() : () -> ()
    %30 = vector.broadcast %cst_13 : f32 to vector<16x16xf32>
    %31 = arith.select %16, %29, %30 : vector<16x16xi1>, vector<16x16xf32>
    %cst_14 = arith.constant dense<0xFF800000> : vector<16xf32>
    %32 = vector.multi_reduction <maximumf>, %31, %cst_14 [1] : vector<16x16xf32> to vector<16xf32>
    %33 = vector.shape_cast %32 : vector<16xf32> to vector<16x1xf32>
    %cst_15 = arith.constant 0.000000e+00 : f32
    %34 = vector.broadcast %cst_15 : f32 to vector<16x1xf32>
    %35 = arith.select %22, %33, %34 : vector<16x1xi1>, vector<16x1xf32>
    %36 = vector.broadcast %35 : vector<16x1xf32> to vector<16x16xf32>
    %37 = arith.subf %31, %36 : vector<16x16xf32>
    %38 = math.exp %37 : vector<16x16xf32>
    %cst_16 = arith.constant dense<0.000000e+00> : vector<16xf32>
    %39 = vector.multi_reduction <add>, %38, %cst_16 [1] : vector<16x16xf32> to vector<16xf32>
    %40 = vector.shape_cast %39 : vector<16xf32> to vector<16x1xf32>
    %cst_17 = arith.constant 0.000000e+00 : f32
    %41 = vector.broadcast %cst_17 : f32 to vector<16x1xf32>
    %42 = arith.cmpf ogt, %40, %41 : vector<16x1xf32>
    %cst_18 = arith.constant 1.000000e+00 : f32
    %43 = vector.broadcast %cst_18 : f32 to vector<16x1xf32>
    %44 = arith.select %42, %40, %43 : vector<16x1xi1>, vector<16x1xf32>
    %45 = tpu.reciprocal %44 {approx = true} : vector<16x1xf32> -> vector<16x1xf32>
    %46 = vector.broadcast %45 : vector<16x1xf32> to vector<16x16xf32>
    %47 = arith.mulf %38, %46 : vector<16x16xf32>
    %48 = arith.truncf %47 : vector<16x16xf32> to vector<16x16xbf16>
    %cst_19 = arith.constant dense<0.000000e+00> : vector<16x8xf32>
    %49 = tpu.matmul %48, %28, %cst_19 {dimension_numbers = #tpu.dot_dimension_numbers<[1], [0], [0], [1], [0, 0, 1, 1], [], []>} : vector<16x16xbf16>, vector<16x8xbf16>, vector<16x8xf32> -> vector<16x8xf32>
    %c0_20 = arith.constant 0 : index
    %c0_21 = arith.constant 0 : index
    %50 = vector.load %arg8[%c0_20, %c0_21] : memref<16x32xf32, #tpu.memory_space<vmem>>, vector<16x8xf32>
    tpu.vector_store %arg8[%c0_20, %c0_21], %49 {strides = array<i32>} : memref<16x32xf32, #tpu.memory_space<vmem>>, vector<16x8xf32>,
    %51 = vector.extract_strided_slice %6 {offsets = [0, 8], sizes = [16, 8], strides = [1, 1]} : vector<16x96xf32> to vector<16x8xf32>
    %52 = arith.truncf %51 : vector<16x8xf32> to vector<16x8xbf16>
    %53 = vector.extract_strided_slice %6 {offsets = [0, 40], sizes = [16, 8], strides = [1, 1]} : vector<16x96xf32> to vector<16x8xf32>
    %54 = arith.truncf %53 : vector<16x8xf32> to vector<16x8xbf16>
    %55 = vector.extract_strided_slice %6 {offsets = [0, 72], sizes = [16, 8], strides = [1, 1]} : vector<16x96xf32> to vector<16x8xf32>
    %56 = arith.truncf %55 : vector<16x8xf32> to vector<16x8xbf16>
    "tpu.trace_start"() <{level = 10 : i32, message = "td,sd->ts"}> : () -> ()
    %cst_22 = arith.constant dense<0.000000e+00> : vector<16x16xf32>
    %57 = tpu.matmul %52, %54, %cst_22 {dimension_numbers = #tpu.dot_dimension_numbers<[1], [1], [0], [0], [0, 0, 1, 0], [], []>} : vector<16x8xbf16>, vector<16x8xbf16>, vector<16x16xf32> -> vector<16x16xf32>
    %cst_23 = arith.constant 0xFF800000 : f32
    "tpu.trace_stop"() : () -> ()
    %58 = vector.broadcast %cst_23 : f32 to vector<16x16xf32>
    %59 = arith.select %16, %57, %58 : vector<16x16xi1>, vector<16x16xf32>
    %cst_24 = arith.constant dense<0xFF800000> : vector<16xf32>
    %60 = vector.multi_reduction <maximumf>, %59, %cst_24 [1] : vector<16x16xf32> to vector<16xf32>
    %61 = vector.shape_cast %60 : vector<16xf32> to vector<16x1xf32>
    %cst_25 = arith.constant 0.000000e+00 : f32
    %62 = vector.broadcast %cst_25 : f32 to vector<16x1xf32>
    %63 = arith.select %22, %61, %62 : vector<16x1xi1>, vector<16x1xf32>
    %64 = vector.broadcast %63 : vector<16x1xf32> to vector<16x16xf32>
    %65 = arith.subf %59, %64 : vector<16x16xf32>
    %66 = math.exp %65 : vector<16x16xf32>
    %cst_26 = arith.constant dense<0.000000e+00> : vector<16xf32>
    %67 = vector.multi_reduction <add>, %66, %cst_26 [1] : vector<16x16xf32> to vector<16xf32>
    %68 = vector.shape_cast %67 : vector<16xf32> to vector<16x1xf32>
    %cst_27 = arith.constant 0.000000e+00 : f32
    %69 = vector.broadcast %cst_27 : f32 to vector<16x1xf32>
    %70 = arith.cmpf ogt, %68, %69 : vector<16x1xf32>
    %cst_28 = arith.constant 1.000000e+00 : f32
    %71 = vector.broadcast %cst_28 : f32 to vector<16x1xf32>
    %72 = arith.select %70, %68, %71 : vector<16x1xi1>, vector<16x1xf32>
    %73 = tpu.reciprocal %72 {approx = true} : vector<16x1xf32> -> vector<16x1xf32>
    %74 = vector.broadcast %73 : vector<16x1xf32> to vector<16x16xf32>
    %75 = arith.mulf %66, %74 : vector<16x16xf32>
    %76 = arith.truncf %75 : vector<16x16xf32> to vector<16x16xbf16>
    %cst_29 = arith.constant dense<0.000000e+00> : vector<16x8xf32>
    %77 = tpu.matmul %76, %56, %cst_29 {dimension_numbers = #tpu.dot_dimension_numbers<[1], [0], [0], [1], [0, 0, 1, 1], [], []>} : vector<16x16xbf16>, vector<16x8xbf16>, vector<16x8xf32> -> vector<16x8xf32>
    %c0_30 = arith.constant 0 : index
    %c8 = arith.constant 8 : index
    %78 = vector.load %arg8[%c0_30, %c8] : memref<16x32xf32, #tpu.memory_space<vmem>>, vector<16x8xf32>
    tpu.vector_store %arg8[%c0_30, %c8], %77 {strides = array<i32>} : memref<16x32xf32, #tpu.memory_space<vmem>>, vector<16x8xf32>,
    %79 = vector.extract_strided_slice %6 {offsets = [0, 16], sizes = [16, 8], strides = [1, 1]} : vector<16x96xf32> to vector<16x8xf32>
    %80 = arith.truncf %79 : vector<16x8xf32> to vector<16x8xbf16>
    %81 = vector.extract_strided_slice %6 {offsets = [0, 48], sizes = [16, 8], strides = [1, 1]} : vector<16x96xf32> to vector<16x8xf32>
    %82 = arith.truncf %81 : vector<16x8xf32> to vector<16x8xbf16>
    %83 = vector.extract_strided_slice %6 {offsets = [0, 80], sizes = [16, 8], strides = [1, 1]} : vector<16x96xf32> to vector<16x8xf32>
    %84 = arith.truncf %83 : vector<16x8xf32> to vector<16x8xbf16>
    "tpu.trace_start"() <{level = 10 : i32, message = "td,sd->ts"}> : () -> ()
    %cst_31 = arith.constant dense<0.000000e+00> : vector<16x16xf32>
    %85 = tpu.matmul %80, %82, %cst_31 {dimension_numbers = #tpu.dot_dimension_numbers<[1], [1], [0], [0], [0, 0, 1, 0], [], []>} : vector<16x8xbf16>, vector<16x8xbf16>, vector<16x16xf32> -> vector<16x16xf32>
    %cst_32 = arith.constant 0xFF800000 : f32
    "tpu.trace_stop"() : () -> ()
    %86 = vector.broadcast %cst_32 : f32 to vector<16x16xf32>
    %87 = arith.select %16, %85, %86 : vector<16x16xi1>, vector<16x16xf32>
    %cst_33 = arith.constant dense<0xFF800000> : vector<16xf32>
    %88 = vector.multi_reduction <maximumf>, %87, %cst_33 [1] : vector<16x16xf32> to vector<16xf32>
    %89 = vector.shape_cast %88 : vector<16xf32> to vector<16x1xf32>
    %cst_34 = arith.constant 0.000000e+00 : f32
    %90 = vector.broadcast %cst_34 : f32 to vector<16x1xf32>
    %91 = arith.select %22, %89, %90 : vector<16x1xi1>, vector<16x1xf32>
    %92 = vector.broadcast %91 : vector<16x1xf32> to vector<16x16xf32>
    %93 = arith.subf %87, %92 : vector<16x16xf32>
    %94 = math.exp %93 : vector<16x16xf32>
    %cst_35 = arith.constant dense<0.000000e+00> : vector<16xf32>
    %95 = vector.multi_reduction <add>, %94, %cst_35 [1] : vector<16x16xf32> to vector<16xf32>
    %96 = vector.shape_cast %95 : vector<16xf32> to vector<16x1xf32>
    %cst_36 = arith.constant 0.000000e+00 : f32
    %97 = vector.broadcast %cst_36 : f32 to vector<16x1xf32>
    %98 = arith.cmpf ogt, %96, %97 : vector<16x1xf32>
    %cst_37 = arith.constant 1.000000e+00 : f32
    %99 = vector.broadcast %cst_37 : f32 to vector<16x1xf32>
    %100 = arith.select %98, %96, %99 : vector<16x1xi1>, vector<16x1xf32>
    %101 = tpu.reciprocal %100 {approx = true} : vector<16x1xf32> -> vector<16x1xf32>
    %102 = vector.broadcast %101 : vector<16x1xf32> to vector<16x16xf32>
    %103 = arith.mulf %94, %102 : vector<16x16xf32>
    %104 = arith.truncf %103 : vector<16x16xf32> to vector<16x16xbf16>
    %cst_38 = arith.constant dense<0.000000e+00> : vector<16x8xf32>
    %105 = tpu.matmul %104, %84, %cst_38 {dimension_numbers = #tpu.dot_dimension_numbers<[1], [0], [0], [1], [0, 0, 1, 1], [], []>} : vector<16x16xbf16>, vector<16x8xbf16>, vector<16x8xf32> -> vector<16x8xf32>
    %c0_39 = arith.constant 0 : index
    %c16 = arith.constant 16 : index
    %106 = vector.load %arg8[%c0_39, %c16] : memref<16x32xf32, #tpu.memory_space<vmem>>, vector<16x8xf32>
    tpu.vector_store %arg8[%c0_39, %c16], %105 {strides = array<i32>} : memref<16x32xf32, #tpu.memory_space<vmem>>, vector<16x8xf32>,
    %107 = vector.extract_strided_slice %6 {offsets = [0, 24], sizes = [16, 8], strides = [1, 1]} : vector<16x96xf32> to vector<16x8xf32>
    %108 = arith.truncf %107 : vector<16x8xf32> to vector<16x8xbf16>
    %109 = vector.extract_strided_slice %6 {offsets = [0, 56], sizes = [16, 8], strides = [1, 1]} : vector<16x96xf32> to vector<16x8xf32>
    %110 = arith.truncf %109 : vector<16x8xf32> to vector<16x8xbf16>
    %111 = vector.extract_strided_slice %6 {offsets = [0, 88], sizes = [16, 8], strides = [1, 1]} : vector<16x96xf32> to vector<16x8xf32>
    %112 = arith.truncf %111 : vector<16x8xf32> to vector<16x8xbf16>
    "tpu.trace_start"() <{level = 10 : i32, message = "td,sd->ts"}> : () -> ()
    %cst_40 = arith.constant dense<0.000000e+00> : vector<16x16xf32>
    %113 = tpu.matmul %108, %110, %cst_40 {dimension_numbers = #tpu.dot_dimension_numbers<[1], [1], [0], [0], [0, 0, 1, 0], [], []>} : vector<16x8xbf16>, vector<16x8xbf16>, vector<16x16xf32> -> vector<16x16xf32>
    %cst_41 = arith.constant 0xFF800000 : f32
    "tpu.trace_stop"() : () -> ()
    %114 = vector.broadcast %cst_41 : f32 to vector<16x16xf32>
    %115 = arith.select %16, %113, %114 : vector<16x16xi1>, vector<16x16xf32>
    %cst_42 = arith.constant dense<0xFF800000> : vector<16xf32>
    %116 = vector.multi_reduction <maximumf>, %115, %cst_42 [1] : vector<16x16xf32> to vector<16xf32>
    %117 = vector.shape_cast %116 : vector<16xf32> to vector<16x1xf32>
    %cst_43 = arith.constant 0.000000e+00 : f32
    %118 = vector.broadcast %cst_43 : f32 to vector<16x1xf32>
    %119 = arith.select %22, %117, %118 : vector<16x1xi1>, vector<16x1xf32>
    %120 = vector.broadcast %119 : vector<16x1xf32> to vector<16x16xf32>
    %121 = arith.subf %115, %120 : vector<16x16xf32>
    %122 = math.exp %121 : vector<16x16xf32>
    %cst_44 = arith.constant dense<0.000000e+00> : vector<16xf32>
    %123 = vector.multi_reduction <add>, %122, %cst_44 [1] : vector<16x16xf32> to vector<16xf32>
    %124 = vector.shape_cast %123 : vector<16xf32> to vector<16x1xf32>
    %cst_45 = arith.constant 0.000000e+00 : f32
    %125 = vector.broadcast %cst_45 : f32 to vector<16x1xf32>
    %126 = arith.cmpf ogt, %124, %125 : vector<16x1xf32>
    %cst_46 = arith.constant 1.000000e+00 : f32
    %127 = vector.broadcast %cst_46 : f32 to vector<16x1xf32>
    %128 = arith.select %126, %124, %127 : vector<16x1xi1>, vector<16x1xf32>
    %129 = tpu.reciprocal %128 {approx = true} : vector<16x1xf32> -> vector<16x1xf32>
    %130 = vector.broadcast %129 : vector<16x1xf32> to vector<16x16xf32>
    %131 = arith.mulf %122, %130 : vector<16x16xf32>
    %132 = arith.truncf %131 : vector<16x16xf32> to vector<16x16xbf16>
    %cst_47 = arith.constant dense<0.000000e+00> : vector<16x8xf32>
    %133 = tpu.matmul %132, %112, %cst_47 {dimension_numbers = #tpu.dot_dimension_numbers<[1], [0], [0], [1], [0, 0, 1, 1], [], []>} : vector<16x16xbf16>, vector<16x8xbf16>, vector<16x8xf32> -> vector<16x8xf32>
    %c0_48 = arith.constant 0 : index
    %c24 = arith.constant 24 : index
    %134 = vector.load %arg8[%c0_48, %c24] : memref<16x32xf32, #tpu.memory_space<vmem>>, vector<16x8xf32>
    tpu.vector_store %arg8[%c0_48, %c24], %133 {strides = array<i32>} : memref<16x32xf32, #tpu.memory_space<vmem>>, vector<16x8xf32>,
    %c0_49 = arith.constant 0 : index
    %c0_50 = arith.constant 0 : index
    %135 = vector.load %arg8[%c0_49, %c0_50] : memref<16x32xf32, #tpu.memory_space<vmem>>, vector<16x32xf32>
    %136 = arith.truncf %135 : vector<16x32xf32> to vector<16x32xbf16>
    %c0_51 = arith.constant 0 : index
    %c0_52 = arith.constant 0 : index
    %137 = vector.load %arg5[%c0_51, %c0_52] : memref<32x32xbf16, #tpu.memory_space<vmem>>, vector<32x32xbf16>
    %cst_53 = arith.constant dense<0.000000e+00> : vector<16x32xf32>
    %138 = tpu.matmul %136, %137, %cst_53 {dimension_numbers = #tpu.dot_dimension_numbers<[1], [0], [0], [1], [0, 0, 1, 1], [], []>} : vector<16x32xbf16>, vector<32x32xbf16>, vector<16x32xf32> -> vector<16x32xf32>
    %c0_54 = arith.constant 0 : index
    %c0_55 = arith.constant 0 : index
    %139 = vector.load %arg6[%c0_54, %c0_55] : memref<1x32xf32, #tpu.memory_space<vmem>>, vector<1x32xf32>
    %140 = vector.broadcast %139 : vector<1x32xf32> to vector<16x32xf32>
    %141 = arith.addf %138, %140 : vector<16x32xf32>
    %142 = vector.shape_cast %141 : vector<16x32xf32> to vector<1x16x32xf32>
    %c0_56 = arith.constant 0 : index
    %c0_57 = arith.constant 0 : index
    %c0_58 = arith.constant 0 : index
    %143 = vector.load %arg7[%c0_56, %c0_57, %c0_58] : memref<1x16x32xf32, #tpu.memory_space<vmem>>, vector<1x16x32xf32>
    tpu.vector_store %arg7[%c0_56, %c0_57, %c0_58], %142 {strides = array<i32>} : memref<1x16x32xf32, #tpu.memory_space<vmem>>, vector<1x16x32xf32>,
    return
  }
  func.func @transform_0(%arg0: i32) -> (i32, i32, i32) {
    %c0_i32 = arith.constant 0 : i32
    %c0_i32_0 = arith.constant 0 : i32
    %c0_i32_1 = arith.constant 0 : i32
    return %arg0, %c0_i32, %c0_i32_0 : i32, i32, i32
  }
  func.func @transform_1(%arg0: i32) -> (i32, i32, i32) {
    %c0_i32 = arith.constant 0 : i32
    %c0_i32_0 = arith.constant 0 : i32
    %c0_i32_1 = arith.constant 0 : i32
    return %arg0, %c0_i32, %c0_i32_0 : i32, i32, i32
  }
  func.func @transform_2(%arg0: i32) -> (i32, i32) {
    %c0_i32 = arith.constant 0 : i32
    %c0_i32_0 = arith.constant 0 : i32
    %c0_i32_1 = arith.constant 0 : i32
    return %c0_i32, %c0_i32_0 : i32, i32
  }
  func.func @transform_3(%arg0: i32) -> (i32, i32) {
    %c0_i32 = arith.constant 0 : i32
    %c0_i32_0 = arith.constant 0 : i32
    %c0_i32_1 = arith.constant 0 : i32
    return %c0_i32, %c0_i32_0 : i32, i32
  }
  func.func @transform_4(%arg0: i32) -> (i32, i32) {
    %c0_i32 = arith.constant 0 : i32
    %c0_i32_0 = arith.constant 0 : i32
    %c0_i32_1 = arith.constant 0 : i32
    return %c0_i32, %c0_i32_0 : i32, i32
  }
  func.func @transform_5(%arg0: i32) -> (i32, i32) {
    %c0_i32 = arith.constant 0 : i32
    %c0_i32_0 = arith.constant 0 : i32
    %c0_i32_1 = arith.constant 0 : i32
    return %c0_i32, %c0_i32_0 : i32, i32
  }
  func.func @transform_6(%arg0: i32) -> (i32, i32, i32) {
    %c0_i32 = arith.constant 0 : i32
    %c0_i32_0 = arith.constant 0 : i32
    %c0_i32_1 = arith.constant 0 : i32
    return %arg0, %c0_i32, %c0_i32_0 : i32, i32, i32
  }
}

</mosaic_0001>

<llo_original>
// kernel: tpu_custom_call.1
$region0: #{tpu_custom_call.1}
  #allocation0 [shape = 'u32[]', space=smem, size = 0x4, offset = 0x4, fixed_abs, tag = 'smem constant byte address 0x4 - core index']
  #allocation1 [shape = 'u32[144,128]{1,0:T(1,128)}', space=vmem, size = 0x12000, scoped, tag = 'internal scratch']
  #allocation2 [shape = 'f32[16,32]{1,0:T(8,128)}', space=vmem, size = 0x2000, scoped, tag = 'scratch operand']
  %s0 = inlined_call_operand.hbm [shape: bf16[2,16,32], index: 0, kind: input, shape index: {}]
  %s1 = inlined_call_operand.hbm [shape: s32[2,1,16], index: 1, kind: input, shape index: {}]
  %s2 = inlined_call_operand.hbm [shape: bf16[32,96], index: 2, kind: input, shape index: {}]
  %s3 = inlined_call_operand.vmem [shape: f32[1,96], index: 3, kind: input, shape index: {}]
  %s4 = inlined_call_operand.hbm [shape: bf16[32,32], index: 4, kind: input, shape index: {}]
  %s5 = inlined_call_operand.vmem [shape: f32[1,32], index: 5, kind: input, shape index: {}]
  %s6 = inlined_call_operand.hbm [shape: f32[2,16,32], index: 6, kind: output, shape index: {}]
  %s7 = sld [smem:[#allocation0]]
  $region73: #{tpu_custom_call.1} parent=0
    _
  %s9 = ssub.s32 1, %s7
  %s10 = scalar_select 0, %s9, %s7
  $region1: #{tpu_custom_call.1} parent=0
    #allocation3 [shape = 'u8[8192]{0}', space=vmem, size = 0x2000, scoped, tag = 'input window, operand 0']
    #allocation4 [shape = 's32[2]{0}', space=sflag, size = 0x8, scoped, tag = 'scoped memory for tpu_custom_call.1']
    #allocation5 [shape = 's32[2]{0}', space=sflag, size = 0x8, scoped, tag = 'scoped memory for tpu_custom_call.1']
    #allocation6 [shape = 'u8[1024]{0}', space=vmem, size = 0x400, scoped, tag = 'input window, operand 1']
    #allocation7 [shape = 's32[2]{0}', space=sflag, size = 0x8, scoped, tag = 'scoped memory for tpu_custom_call.1']
    #allocation8 [shape = 'u8[8192]{0}', space=vmem, size = 0x2000, scoped, tag = 'input window, operand 2, single buffered']
    #allocation9 [shape = 'u8[8192]{0}', space=vmem, size = 0x2000, scoped, tag = 'input window, operand 4, single buffered']
    #allocation10 [shape = 's32[1]{0}', space=sflag, size = 0x4, scoped, tag = 'scoped memory for tpu_custom_call.1']
    #allocation11 [shape = 'u8[16384]{0}', space=vmem, size = 0x4000, scoped, tag = 'output window, operand 0']
    %11 = vsyncpa [#allocation4], 0
    %s12 = scalar_lea.sflag [#allocation4], 1
    %13 = vsyncpa %s12, 0
    %14 = vsyncpa [#allocation7], 0
    %s15 = scalar_lea.sflag [#allocation7], 1
    %16 = vsyncpa %s15, 0
    %17 = vsyncpa [#allocation10], 0
    %18 = vsyncpa [#allocation5], 0
    %s19 = scalar_lea.sflag [#allocation5], 1
    %20 = vsyncpa %s19, 0
    loop: start=0, step=1, limit=4
    $region2: #{tpu_custom_call.1} parent=1 // loop_pre_header
      _
    $region3: #{tpu_custom_call.1} parent=1 // loop_header
      %s22 = sphi 0, %s26
      %p23 = scmp.ge.s32.totalorder %s22, 4
      %s32 = sphi 0, %s34
      %s35 = sphi 0, %s32
      %s36 = sphi 0, %s35
      %s52 = sphi 0, %s36
      %s58 = sphi 0, %s60
      %s61 = sphi 0, %s58
      %s62 = sphi 0, %s61
      %s78 = sphi 0, %s62
      %s82 = sphi 0, %s82
      %s84 = sphi 0, %s82
      %s85 = sphi 0, %s84
      %s99 = sphi 0, %s85
      %s103 = sphi 0, %s103
      %s105 = sphi 0, %s103
      %s106 = sphi 0, %s105
      %s120 = sphi 0, %s106
      %s124 = sphi 0, %s124
      %s126 = sphi 0, %s124
      %s127 = sphi 0, %s126
      %s141 = sphi 0, %s127
      %s145 = sphi 0, %s145
      %s147 = sphi 0, %s145
      %s148 = sphi 0, %s147
      %s162 = sphi 0, %s148
      %s168 = sphi 0, %s170
      %s171 = sphi 0, %s168
      %s172 = sphi 0, %s171
      %s188 = sphi 0, %s172
    $region4: #{tpu_custom_call.1} parent=1 // loop_header_branch
      %25 = sbr.rel (%p23) target = $region8
    $region5: #{tpu_custom_call.1} parent=1 // loop_body
      %s27 = ssub.s32 %s22, 1
      %s28 = ssub.s32 %s22, 2
      %s29 = sadd.s32 %s22, 1
      %s30 = ssub.s32 %s22, %s29
      %p31 = scmp.eq.s32.totalorder %s30, 0
      %s33 = sadd.s32 %s32, 1
      %s34 = scalar_select %p31, %s32, %s33
      %p37 = pneg %p31
      %p38 = scmp.eq.s32.totalorder %s22, 1
      %p39 = por %p37, %p38
      %p40 = scmp.ne.s32.totalorder %s32, %s35
      %p41 = scmp.eq.s32.totalorder %s22, 0
      %p42 = por %p40, %p41
      %p43 = scmp.ne.s32.totalorder %s32, %s35
      %p44 = scmp.eq.s32.totalorder %s27, 1
      %p45 = por %p43, %p44
      %p46 = scmp.ne.s32.totalorder %s35, %s36
      %p47 = scmp.eq.s32.totalorder %s27, 0
      %p48 = por %p46, %p47
      %p49 = scmp.ne.s32.totalorder %s35, %s36
      %p50 = scmp.eq.s32.totalorder %s28, 1
      %p51 = por %p49, %p50
      %p53 = scmp.ne.s32.totalorder %s36, %s52
      %p54 = scmp.eq.s32.totalorder %s28, 0
      %p55 = por %p53, %p54
      %s56 = ssub.s32 %s22, %s29
      %p57 = scmp.eq.s32.totalorder %s56, 0
      %s59 = sadd.s32 %s58, 1
      %s60 = scalar_select %p57, %s58, %s59
      %p63 = pneg %p57
      %p64 = scmp.eq.s32.totalorder %s22, 1
      %p65 = por %p63, %p64
      %p66 = scmp.ne.s32.totalorder %s58, %s61
      %p67 = scmp.eq.s32.totalorder %s22, 0
      %p68 = por %p66, %p67
      %p69 = scmp.ne.s32.totalorder %s58, %s61
      %p70 = scmp.eq.s32.totalorder %s27, 1
      %p71 = por %p69, %p70
      %p72 = scmp.ne.s32.totalorder %s61, %s62
      %p73 = scmp.eq.s32.totalorder %s27, 0
      %p74 = por %p72, %p73
      %p75 = scmp.ne.s32.totalorder %s61, %s62
      %p76 = scmp.eq.s32.totalorder %s28, 1
      %p77 = por %p75, %p76
      %p79 = scmp.ne.s32.totalorder %s62, %s78
      %p80 = scmp.eq.s32.totalorder %s28, 0
      %p81 = por %p79, %p80
      %s83 = sadd.s32 %s82, 1
      %p86 = scmp.eq.s32.totalorder %s22, 1
      %p87 = scmp.ne.s32.totalorder %s82, %s84
      %p88 = scmp.eq.s32.totalorder %s22, 0
      %p89 = por %p87, %p88
      %p90 = scmp.ne.s32.totalorder %s82, %s84
      %p91 = scmp.eq.s32.totalorder %s27, 1
      %p92 = por %p90, %p91
      %p93 = scmp.ne.s32.totalorder %s84, %s85
      %p94 = scmp.eq.s32.totalorder %s27, 0
      %p95 = por %p93, %p94
      %p96 = scmp.ne.s32.totalorder %s84, %s85
      %p97 = scmp.eq.s32.totalorder %s28, 1
      %p98 = por %p96, %p97
      %p100 = scmp.ne.s32.totalorder %s85, %s99
      %p101 = scmp.eq.s32.totalorder %s28, 0
      %p102 = por %p100, %p101
      %s104 = sadd.s32 %s103, 1
      %p107 = scmp.eq.s32.totalorder %s22, 1
      %p108 = scmp.ne.s32.totalorder %s103, %s105
      %p109 = scmp.eq.s32.totalorder %s22, 0
      %p110 = por %p108, %p109
      %p111 = scmp.ne.s32.totalorder %s103, %s105
      %p112 = scmp.eq.s32.totalorder %s27, 1
      %p113 = por %p111, %p112
      %p114 = scmp.ne.s32.totalorder %s105, %s106
      %p115 = scmp.eq.s32.totalorder %s27, 0
      %p116 = por %p114, %p115
      %p117 = scmp.ne.s32.totalorder %s105, %s106
      %p118 = scmp.eq.s32.totalorder %s28, 1
      %p119 = por %p117, %p118
      %p121 = scmp.ne.s32.totalorder %s106, %s120
      %p122 = scmp.eq.s32.totalorder %s28, 0
      %p123 = por %p121, %p122
      %s125 = sadd.s32 %s124, 1
      %p128 = scmp.eq.s32.totalorder %s22, 1
      %p129 = scmp.ne.s32.totalorder %s124, %s126
      %p130 = scmp.eq.s32.totalorder %s22, 0
      %p131 = por %p129, %p130
      %p132 = scmp.ne.s32.totalorder %s124, %s126
      %p133 = scmp.eq.s32.totalorder %s27, 1
      %p134 = por %p132, %p133
      %p135 = scmp.ne.s32.totalorder %s126, %s127
      %p136 = scmp.eq.s32.totalorder %s27, 0
      %p137 = por %p135, %p136
      %p138 = scmp.ne.s32.totalorder %s126, %s127
      %p139 = scmp.eq.s32.totalorder %s28, 1
      %p140 = por %p138, %p139
      %p142 = scmp.ne.s32.totalorder %s127, %s141
      %p143 = scmp.eq.s32.totalorder %s28, 0
      %p144 = por %p142, %p143
      %s146 = sadd.s32 %s145, 1
      %p149 = scmp.eq.s32.totalorder %s22, 1
      %p150 = scmp.ne.s32.totalorder %s145, %s147
      %p151 = scmp.eq.s32.totalorder %s22, 0
      %p152 = por %p150, %p151
      %p153 = scmp.ne.s32.totalorder %s145, %s147
      %p154 = scmp.eq.s32.totalorder %s27, 1
      %p155 = por %p153, %p154
      %p156 = scmp.ne.s32.totalorder %s147, %s148
      %p157 = scmp.eq.s32.totalorder %s27, 0
      %p158 = por %p156, %p157
      %p159 = scmp.ne.s32.totalorder %s147, %s148
      %p160 = scmp.eq.s32.totalorder %s28, 1
      %p161 = por %p159, %p160
      %p163 = scmp.ne.s32.totalorder %s148, %s162
      %p164 = scmp.eq.s32.totalorder %s28, 0
      %p165 = por %p163, %p164
      %s166 = ssub.s32 %s22, %s29
      %p167 = scmp.eq.s32.totalorder %s166, 0
      %s169 = sadd.s32 %s168, 1
      %s170 = scalar_select %p167, %s168, %s169
      %p173 = pneg %p167
      %p174 = scmp.eq.s32.totalorder %s22, 1
      %p175 = por %p173, %p174
      %p176 = scmp.ne.s32.totalorder %s168, %s171
      %p177 = scmp.eq.s32.totalorder %s22, 0
      %p178 = por %p176, %p177
      %p179 = scmp.ne.s32.totalorder %s168, %s171
      %p180 = scmp.eq.s32.totalorder %s27, 1
      %p181 = por %p179, %p180
      %p182 = scmp.ne.s32.totalorder %s171, %s172
      %p183 = scmp.eq.s32.totalorder %s27, 0
      %p184 = por %p182, %p183
      %p185 = scmp.ne.s32.totalorder %s171, %s172
      %p186 = scmp.eq.s32.totalorder %s28, 1
      %p187 = por %p185, %p186
      %p189 = scmp.ne.s32.totalorder %s172, %s188
      %p190 = scmp.eq.s32.totalorder %s28, 0
      %p191 = por %p189, %p190
      %p192 = scmp.le.s32.totalorder 1, %s22
      %p193 = scmp.lt.s32.totalorder %s22, 3
      %p194 = pnand %p192, %p193
      %p195 = pneg %p194
      // Predicated region
      $region9: #{tpu_custom_call.1} parent=5 // pred_check
        _
      $region10: #{tpu_custom_call.1} parent=5 // pred_check_branch
        %197 = sbr.rel (%p194) target = $region12
      $region11: #{tpu_custom_call.1} parent=5 // pred_region
        %s198 = ssub.s32 %s22, 1
        // Predicated region
        $region13: #{tpu_custom_call.1} parent=11 // pred_check
          %p199 = pneg %p95
        $region14: #{tpu_custom_call.1} parent=11 // pred_check_branch
          %201 = sbr.rel (%p199) target = $region16
        $region15: #{tpu_custom_call.1} parent=11 // pred_region
          %s203 = ssub.s32 256, 256
          %204 = vsyncadd [#allocation7], %s203
          %s205 = sshll.u32 [#allocation8], 4
          %s206 = int_to_ptr.vmem [resolvable:$true] %s205
          %211 = dma.hbm_to_vmem [thread:$0]  %s2, 256, %s206, [#allocation7], 64, 64, 4
        $region16: #{tpu_custom_call.1} parent=11 // pred_fallthru
          _
        // Predicated region
        $region17: #{tpu_custom_call.1} parent=11 // pred_check
          %p212 = pneg %p116
        $region18: #{tpu_custom_call.1} parent=11 // pred_check_branch
          %214 = sbr.rel (%p212) target = $region20
        $region19: #{tpu_custom_call.1} parent=11 // pred_region
          _
        $region20: #{tpu_custom_call.1} parent=11 // pred_fallthru
          _
        // Predicated region
        $region21: #{tpu_custom_call.1} parent=11 // pred_check
          %p215 = pneg %p137
        $region22: #{tpu_custom_call.1} parent=11 // pred_check_branch
          %217 = sbr.rel (%p215) target = $region24
        $region23: #{tpu_custom_call.1} parent=11 // pred_region
          %s219 = ssub.s32 256, 256
          %220 = vsyncadd [#allocation10], %s219
          %s221 = sshll.u32 [#allocation9], 4
          %s222 = int_to_ptr.vmem [resolvable:$true] %s221
          %227 = dma.hbm_to_vmem [thread:$0]  %s4, 256, %s222, [#allocation10], 64, 64, 4
        $region24: #{tpu_custom_call.1} parent=11 // pred_fallthru
          _
        // Predicated region
        $region25: #{tpu_custom_call.1} parent=11 // pred_check
          %p228 = pneg %p158
        $region26: #{tpu_custom_call.1} parent=11 // pred_check_branch
          %230 = sbr.rel (%p228) target = $region28
        $region27: #{tpu_custom_call.1} parent=11 // pred_region
          _
        $region28: #{tpu_custom_call.1} parent=11 // pred_fallthru
          _
      $region12: #{tpu_custom_call.1} parent=5 // pred_fallthru
        _
      %p231 = scmp.lt.s32.totalorder %s22, 2
      // Predicated region
      $region29: #{tpu_custom_call.1} parent=5 // pred_check
        %p232 = pneg %p231
      $region30: #{tpu_custom_call.1} parent=5 // pred_check_branch
        %234 = sbr.rel (%p232) target = $region32
      $region31: #{tpu_custom_call.1} parent=5 // pred_region
        // Predicated region
        $region33: #{tpu_custom_call.1} parent=31 // pred_check
          %p235 = pneg %p42
        $region34: #{tpu_custom_call.1} parent=31 // pred_check_branch
          %237 = sbr.rel (%p235) target = $region36
        $region35: #{tpu_custom_call.1} parent=31 // pred_region
          %s238 = sand.u32 %s32, 1
          %s239 = scalar_lea.sflag [#allocation4], %s238
          %s240 = sand.u32 %s32, 1
          %s241 = smul.addr %s240, 8
          %s242 = scalar_lea.vmem [#allocation3], %s241
          %s244 = ssub.s32 128, 128
          %245 = vsyncadd %s239, %s244
          %s246 = smul.addr %s22, 2
          %s247 = smul.addr %s246, 64
          %s248 = scalar_lea.hbm %s0, %s247
          %s249 = sshll.u32 %s242, 4
          %s250 = int_to_ptr.vmem [resolvable:$true] %s249
          %255 = dma.hbm_to_vmem [thread:$0]  %s248, 128, %s250, %s239, 64, 64, 4
        $region36: #{tpu_custom_call.1} parent=31 // pred_fallthru
          _
        // Predicated region
        $region37: #{tpu_custom_call.1} parent=31 // pred_check
          %p256 = pneg %p68
        $region38: #{tpu_custom_call.1} parent=31 // pred_check_branch
          %258 = sbr.rel (%p256) target = $region40
        $region39: #{tpu_custom_call.1} parent=31 // pred_region
          %s259 = sand.u32 %s22, 1
          %s260 = scalar_lea.sflag [#allocation7], %s259
          %s261 = sand.u32 %s58, 1
          %s262 = scalar_lea.vmem [#allocation6], %s261
          %s264 = ssub.s32 16, 16
          %265 = vsyncadd %s260, %s264
          %s266 = smul.addr %s22, 16
          %s267 = scalar_lea.hbm %s1, %s266
          %s269 = sshll.u32 %s262, 4
          %s270 = int_to_ptr.vmem [resolvable:$true] %s269
          %272 = dma.hbm_to_vmem [thread:$0]  %s267, 16, %s270, %s260
        $region40: #{tpu_custom_call.1} parent=31 // pred_fallthru
          _
      $region32: #{tpu_custom_call.1} parent=5 // pred_fallthru
        _
      %p273 = scmp.le.s32.totalorder 1, %s22
      %p274 = scmp.lt.s32.totalorder %s22, 3
      %p275 = pnand %p273, %p274
      %p276 = pneg %p275
      // Predicated region
      $region41: #{tpu_custom_call.1} parent=5 // pred_check
        _
      $region42: #{tpu_custom_call.1} parent=5 // pred_check_branch
        %278 = sbr.rel (%p275) target = $region44
      $region43: #{tpu_custom_call.1} parent=5 // pred_region
        %s279 = ssub.s32 %s22, 1
        %s280 = sand.u32 %s35, 1
        %s281 = scalar_lea.sflag [#allocation4], %s280
        %s282 = sand.u32 %s35, 1
        %s283 = smul.addr %s282, 8
        %s284 = scalar_lea.vmem [#allocation3], %s283
        // Predicated region
        $region45: #{tpu_custom_call.1} parent=43 // pred_check
          %p285 = pneg %p48
        $region46: #{tpu_custom_call.1} parent=43 // pred_check_branch
          %287 = sbr.rel (%p285) target = $region48
        $region47: #{tpu_custom_call.1} parent=43 // pred_region
          %288 = dma.done %s281, 128
        $region48: #{tpu_custom_call.1} parent=43 // pred_fallthru
          _
        %s289 = sand.u32 %s27, 1
        %s290 = scalar_lea.sflag [#allocation7], %s289
        %s291 = sand.u32 %s61, 1
        %s292 = scalar_lea.vmem [#allocation6], %s291
        // Predicated region
        $region49: #{tpu_custom_call.1} parent=43 // pred_check
          %p293 = pneg %p74
        $region50: #{tpu_custom_call.1} parent=43 // pred_check_branch
          %295 = sbr.rel (%p293) target = $region52
        $region51: #{tpu_custom_call.1} parent=43 // pred_region
          %296 = dma.done %s290, 16
        $region52: #{tpu_custom_call.1} parent=43 // pred_fallthru
          _
        // Predicated region
        $region53: #{tpu_custom_call.1} parent=43 // pred_check
          %p297 = pneg %p95
        $region54: #{tpu_custom_call.1} parent=43 // pred_check_branch
          %299 = sbr.rel (%p297) target = $region56
        $region55: #{tpu_custom_call.1} parent=43 // pred_region
          %300 = dma.done [#allocation7], 256
        $region56: #{tpu_custom_call.1} parent=43 // pred_fallthru
          _
        // Predicated region
        $region57: #{tpu_custom_call.1} parent=43 // pred_check
          %p301 = pneg %p137
        $region58: #{tpu_custom_call.1} parent=43 // pred_check_branch
          %303 = sbr.rel (%p301) target = $region60
        $region59: #{tpu_custom_call.1} parent=43 // pred_region
          %304 = dma.done [#allocation10], 256
        $region60: #{tpu_custom_call.1} parent=43 // pred_fallthru
          _
        %s305 = sand.u32 %s35, 1
        %s306 = scalar_lea.sflag [#allocation4], %s305
        %s307 = sand.u32 %s35, 1
        %s308 = smul.addr %s307, 8
        %s309 = scalar_lea.vmem [#allocation3], %s308
        %p310 = pneg %p48
        %p311 = pneg %p45
        %s312 = sand.u32 %s27, 1
        %s313 = scalar_lea.sflag [#allocation7], %s312
        %s314 = sand.u32 %s61, 1
        %s315 = scalar_lea.vmem [#allocation6], %s314
        %p316 = pneg %p74
        %p317 = pneg %p71
        %p318 = pneg %p95
        %p319 = pneg %p92
        %p320 = pneg %p116
        %p321 = pneg %p113
        %p322 = pneg %p137
        %p323 = pneg %p134
        %p324 = pneg %p158
        %p325 = pneg %p155
        %p326 = pneg %p184
        %p327 = pneg %p181
        %s328 = sand.u32 %s171, 1
        %s329 = scalar_lea.sflag [#allocation5], %s328
        %s330 = sand.u32 %s171, 1
        %s331 = smul.addr %s330, 16
        %s332 = scalar_lea.vmem [#allocation11], %s331
        %v334 = vld [vmem:[%s284] sm:$0xf]
        %v335 = vld [vmem:[%s284 + $0x4] sm:$0xf]
        %v336 = vld [vmem:[#allocation8] sm:$0xf]
        %v337 = vld [vmem:[#allocation8 + $0x4] sm:$0xf]
        %v338 = vld [vmem:[#allocation8 + $0x8] sm:$0xf]
        %v339 = vld [vmem:[#allocation8 + $0xc] sm:$0xf]
        %v340 = vld [vmem:[%s3] sm:$0x1]
        %v342 = vlaneseq
        %v343 = vshrl.u32 %v342, 7
        %v344 = vsub.s32 0, %v343
        %v345 = vrot.slane %v340, %v344
        %v349 = vunpack.c.l.b16 %v334
        %v350 = vunpack.c.l.b16 %v335
        %v351 = vpack.c.b16 %v350, %v349
        %v356 = vunpack.c.l.b16 %v336
        %v357 = vunpack.c.l.b16 %v337
        %v358 = vunpack.c.l.b16 %v338
        %v359 = vunpack.c.l.b16 %v339
        %v360 = vpack.c.b16 %v357, %v356
        %v361 = vpack.c.b16 %v359, %v358
        %vm364 = vcmask 261120
        %v366 = vsel %vm364, %v351, 0
        %368 = vmatprep.subr.bf16.mxu0 0
        %369 = vmatpush1.bf16.msra.mxu0 0
        %370 = vmatprep.subr.bf16.mxu0 0
        %371 = vmatpush1.bf16.msra.mxu0 0
        %372 = vmatprep.subr.bf16.mxu0 0
        %373 = vmatpush1.bf16.msra.mxu0 0
        %374 = vmatprep.subr.bf16.mxu0 0
        %375 = vmatpush1.bf16.msra.mxu0 0
        %376 = vmatprep.subr.bf16.mxu0 0
        %377 = vmatpush1.bf16.msra.mxu0 0
        %378 = vmatprep.subr.bf16.mxu0 0
        %379 = vmatpush1.bf16.msra.mxu0 0
        %380 = vmatprep.subr.bf16.mxu0 0
        %381 = vmatpush1.bf16.msra.mxu0 %v361
        %382 = vmatprep.subr.bf16.mxu0 0
        %383 = vmatpush1.bf16.msra.mxu0 %v360
        %384 = vmatprep.subr.bf16.mxu0 0
        %385 = vmatpush2.bf16.msra.mxu0 0
        %386 = vmatprep.subr.bf16.mxu0 0
        %387 = vmatpush2.bf16.msra.mxu0 0
        %388 = vmatprep.subr.bf16.mxu0 0
        %389 = vmatpush2.bf16.msra.mxu0 0
        %390 = vmatprep.subr.bf16.mxu0 0
        %391 = vmatpush2.bf16.msra.mxu0 0
        %392 = vmatprep.subr.bf16.mxu0 0
        %393 = vmatpush2.bf16.msra.mxu0 0
        %394 = vmatprep.subr.bf16.mxu0 0
        %395 = vmatpush2.bf16.msra.mxu0 0
        %396 = vmatprep.subr.bf16.mxu0 0
        %397 = vmatpush2.bf16.msra.mxu0 0
        %398 = vmatprep.subr.bf16.mxu0 0
        %399 = vmatpush2.bf16.msra.mxu0 0
        %400 = vmatprep.mubr.bf16.mxu0 0
        %401 = vmatmul.mubr.bf16.gmra.mxu0 %v366
        %v402 = vpop.f32.mrf.mxu0
        %v403 = vadd.f32 %v345, %v402
        %v404 = vpop.f32.mrf.mxu0
        %v405 = vpop.f32.mrf.mxu0
        %v406 = vadd.f32 %v345, %v405
        %v407 = vpop.f32.mrf.mxu0
        %408 = vdwg.mxu0
        %v409 = vld [vmem:[%s292] sm:$0x1]
        %v410 = vcvt.s32.f32 %v409
        %v412 = vlaneseq
        %v413 = vshrl.u32 %v412, 7
        %v414 = vsub.s32 0, %v413
        %v415 = vrot.slane %v410, %v414
        %417 = vxpose.xlu0.b32.start [1/16] %v415, 128
        %418 = vxpose.xlu0.b32.cont [2/16] %v415, 128
        %419 = vxpose.xlu0.b32.cont [3/16] 0.0, 128
        %420 = vxpose.xlu0.b32.cont [4/16] 0.0, 128
        %421 = vxpose.xlu0.b32.cont [5/16] 0.0, 128
        %422 = vxpose.xlu0.b32.cont [6/16] 0.0, 128
        %423 = vxpose.xlu0.b32.cont [7/16] 0.0, 128
        %424 = vxpose.xlu0.b32.cont [8/16] 0.0, 128
        %425 = vxpose.xlu0.b32.cont [9/16] 0.0, 128
        %426 = vxpose.xlu0.b32.cont [10/16] 0.0, 128
        %427 = vxpose.xlu0.b32.cont [11/16] 0.0, 128
        %428 = vxpose.xlu0.b32.cont [12/16] 0.0, 128
        %429 = vxpose.xlu0.b32.cont [13/16] 0.0, 128
        %430 = vxpose.xlu0.b32.cont [14/16] 0.0, 128
        %431 = vxpose.xlu0.b32.cont [15/16] 0.0, 128
        %432 = vxpose.xlu0.b32.end [16/16] 0.0, 128
        %v433 = vpop.trf.xlu0
        %v434 = vpop.trf.xlu0
        %v435 = vpop.trf.xlu0
        %v436 = vpop.trf.xlu0
        %v437 = vpop.trf.xlu0
        %v438 = vpop.trf.xlu0
        %v439 = vpop.trf.xlu0
        %v440 = vpop.trf.xlu0
        %v441 = vpop.trf.xlu0
        %v442 = vpop.trf.xlu0
        %v443 = vpop.trf.xlu0
        %v444 = vpop.trf.xlu0
        %v445 = vpop.trf.xlu0
        %v446 = vpop.trf.xlu0
        %v447 = vpop.trf.xlu0
        %v448 = vpop.trf.xlu0
        %vm449 = vcmp.eq.f32.partialorder %v415, %v433
        %vm450 = vcmp.eq.f32.partialorder %v415, %v434
        %vm451 = vcmp.ge.f32.partialorder %v415, 0.0
        %vm452 = vmand %vm449, %vm451
        %vm453 = vmand %vm450, %vm451
        %v454 = vsel %vm452, 1, 0
        %v455 = vsel %vm453, 1, 0
        %v456 = vcvt.s32.f32 %v454
        %v457 = vcvt.s32.f32 %v455
        %vm458 = vcmask 130048
        %v459 = vsel %vm458, %v456, 0.0
        %460 = vadd.xlane.f32.xlu0 %v459
        %v461 = vpop.xlane.xlu0 %460
        %v462 = vsel %vm458, %v457, 0.0
        %463 = vadd.xlane.f32.xlu0 %v462
        %v464 = vpop.xlane.xlu0 %463
        %vm465 = vcmp.gt.f32.partialorder %v461, 0.0
        %vm466 = vcmp.gt.f32.partialorder %v464, 0.0
        %v467 = vpack.c.bf16 %v406, %v403
        %469 = vrot.lane.b32.xlu0 %v467, 96
        %v470 = vpop.permute.xlu0 %469
        %vm471 = vcmask 64512
        %v473 = vsel %vm471, %v467, 0
        %v476 = vsel %vm471, %v470, 0
        %478 = vmatprep.subr.bf16.mxu0 0
        %479 = vmatpush1.bf16.xpose.msra.mxu0 0
        %480 = vmatprep.subr.bf16.mxu0 0
        %481 = vmatpush1.bf16.xpose.msra.mxu0 0
        %482 = vmatprep.subr.bf16.mxu0 0
        %483 = vmatpush1.bf16.xpose.msra.mxu0 0
        %484 = vmatprep.subr.bf16.mxu0 0
        %485 = vmatpush1.bf16.xpose.msra.mxu0 0
        %486 = vmatprep.subr.bf16.mxu0 0
        %487 = vmatpush1.bf16.xpose.msra.mxu0 0
        %488 = vmatprep.subr.bf16.mxu0 0
        %489 = vmatpush1.bf16.xpose.msra.mxu0 0
        %490 = vmatprep.subr.bf16.mxu0 0
        %491 = vmatpush1.bf16.xpose.msra.mxu0 0
        %492 = vmatprep.subr.bf16.mxu0 0
        %493 = vmatpush1.bf16.xpose.msra.mxu0 %v476
        %494 = vmatprep.subr.bf16.mxu0 0
        %495 = vmatpush2.bf16.xpose.msra.mxu0 0
        %496 = vmatprep.subr.bf16.mxu0 0
        %497 = vmatpush2.bf16.xpose.msra.mxu0 0
        %498 = vmatprep.subr.bf16.mxu0 0
        %499 = vmatpush2.bf16.xpose.msra.mxu0 0
        %500 = vmatprep.subr.bf16.mxu0 0
        %501 = vmatpush2.bf16.xpose.msra.mxu0 0
        %502 = vmatprep.subr.bf16.mxu0 0
        %503 = vmatpush2.bf16.xpose.msra.mxu0 0
        %504 = vmatprep.subr.bf16.mxu0 0
        %505 = vmatpush2.bf16.xpose.msra.mxu0 0
        %506 = vmatprep.subr.bf16.mxu0 0
        %507 = vmatpush2.bf16.xpose.msra.mxu0 0
        %508 = vmatprep.subr.bf16.mxu0 0
        %509 = vmatpush2.bf16.xpose.msra.mxu0 0
        %510 = vmatprep.mubr.bf16.mxu0 0
        %511 = vmatmul.mubr.bf16.gmra.mxu0 %v473
        %v512 = vpop.f32.mrf.mxu0
        %v513 = vadd.f32 0.0, %v512
        %v514 = vpop.f32.mrf.mxu0
        %v515 = vpop.f32.mrf.mxu0
        %v516 = vadd.f32 0.0, %v515
        %v517 = vpop.f32.mrf.mxu0
        %518 = vdwg.mxu0
        %v519 = vsel %vm452, %v513, -inf
        %v520 = vsel %vm453, %v516, -inf
        %v521 = vsel %vm458, %v519, -inf
        %522 = vmax.xlane.f32.xlu0 %v521
        %v523 = vpop.xlane.xlu0 %522
        %v524 = vsel %vm458, %v520, -inf
        %525 = vmax.xlane.f32.xlu0 %v524
        %v526 = vpop.xlane.xlu0 %525
        %v527 = vsel %vm465, %v523, 0.0
        %v528 = vsel %vm466, %v526, 0.0
        %v529 = vsub.f32 %v519, %v527
        %v530 = vsub.f32 %v520, %v528
        %v531 = vmul.f32 %v529, 1.442695
        %v532 = vpow.pop %v531
        %v533 = vmul.f32 %v530, 1.442695
        %v534 = vpow.pop %v533
        %v535 = vsel %vm458, %v532, 0.0
        %536 = vadd.xlane.f32.xlu0 %v535
        %v537 = vpop.xlane.xlu0 %536
        %v538 = vsel %vm458, %v534, 0.0
        %539 = vadd.xlane.f32.xlu0 %v538
        %v540 = vpop.xlane.xlu0 %539
        %vm541 = vcmp.gt.f32.partialorder %v537, 0.0
        %vm542 = vcmp.gt.f32.partialorder %v540, 0.0
        %v543 = vsel %vm541, %v537, 1.0
        %v544 = vsel %vm542, %v540, 1.0
        %v545 = vrcp.pop %v543
        %v546 = vrcp.pop %v544
        %v547 = vmul.f32 %v532, %v545
        %v548 = vmul.f32 %v534, %v546
        %v549 = vpack.c.bf16 %v548, %v547
        %550 = vrot.lane.b32.xlu0 %v467, 64
        %v551 = vpop.permute.xlu0 %550
        %v554 = vsel %vm458, %v549, 0
        %556 = vmatprep.subr.bf16.mxu0 0
        %557 = vmatpush1.bf16.msra.mxu0 0
        %558 = vmatprep.subr.bf16.mxu0 0
        %559 = vmatpush1.bf16.msra.mxu0 0
        %560 = vmatprep.subr.bf16.mxu0 0
        %561 = vmatpush1.bf16.msra.mxu0 0
        %562 = vmatprep.subr.bf16.mxu0 0
        %563 = vmatpush1.bf16.msra.mxu0 0
        %564 = vmatprep.subr.bf16.mxu0 0
        %565 = vmatpush1.bf16.msra.mxu0 0
        %566 = vmatprep.subr.bf16.mxu0 0
        %567 = vmatpush1.bf16.msra.mxu0 0
        %568 = vmatprep.subr.bf16.mxu0 0
        %569 = vmatpush1.bf16.msra.mxu0 0
        %570 = vmatprep.subr.bf16.mxu0 0
        %571 = vmatpush1.bf16.msra.mxu0 %v551
        %572 = vmatprep.subr.bf16.mxu0 0
        %573 = vmatpush2.bf16.msra.mxu0 0
        %574 = vmatprep.subr.bf16.mxu0 0
        %575 = vmatpush2.bf16.msra.mxu0 0
        %576 = vmatprep.subr.bf16.mxu0 0
        %577 = vmatpush2.bf16.msra.mxu0 0
        %578 = vmatprep.subr.bf16.mxu0 0
        %579 = vmatpush2.bf16.msra.mxu0 0
        %580 = vmatprep.subr.bf16.mxu0 0
        %581 = vmatpush2.bf16.msra.mxu0 0
        %582 = vmatprep.subr.bf16.mxu0 0
        %583 = vmatpush2.bf16.msra.mxu0 0
        %584 = vmatprep.subr.bf16.mxu0 0
        %585 = vmatpush2.bf16.msra.mxu0 0
        %586 = vmatprep.subr.bf16.mxu0 0
        %587 = vmatpush2.bf16.msra.mxu0 0
        %588 = vmatprep.mubr.bf16.mxu0 0
        %589 = vmatmul.mubr.bf16.gmra.mxu0 %v554
        %v590 = vpop.f32.mrf.mxu0
        %v591 = vadd.f32 0.0, %v590
        %v592 = vpop.f32.mrf.mxu0
        %v593 = vpop.f32.mrf.mxu0
        %v594 = vadd.f32 0.0, %v593
        %v595 = vpop.f32.mrf.mxu0
        %596 = vdwg.mxu0
        %597 = vst.msk [vmem:[#allocation2] sm:$0xff] %vm471, %v591
        %598 = vst.msk [vmem:[#allocation2 + $0x8] sm:$0xff] %vm471, %v594
        %599 = vrot.lane.b32.xlu0 %v467, 120
        %v600 = vpop.permute.xlu0 %599
        %601 = vrot.lane.b32.xlu0 %v467, 88
        %v602 = vpop.permute.xlu0 %601
        %v604 = vsel %vm471, %v600, 0
        %v607 = vsel %vm471, %v602, 0
        %609 = vmatprep.subr.bf16.mxu0 0
        %610 = vmatpush1.bf16.xpose.msra.mxu0 0
        %611 = vmatprep.subr.bf16.mxu0 0
        %612 = vmatpush1.bf16.xpose.msra.mxu0 0
        %613 = vmatprep.subr.bf16.mxu0 0
        %614 = vmatpush1.bf16.xpose.msra.mxu0 0
        %615 = vmatprep.subr.bf16.mxu0 0
        %616 = vmatpush1.bf16.xpose.msra.mxu0 0
        %617 = vmatprep.subr.bf16.mxu0 0
        %618 = vmatpush1.bf16.xpose.msra.mxu0 0
        %619 = vmatprep.subr.bf16.mxu0 0
        %620 = vmatpush1.bf16.xpose.msra.mxu0 0
        %621 = vmatprep.subr.bf16.mxu0 0
        %622 = vmatpush1.bf16.xpose.msra.mxu0 0
        %623 = vmatprep.subr.bf16.mxu0 0
        %624 = vmatpush1.bf16.xpose.msra.mxu0 %v607
        %625 = vmatprep.subr.bf16.mxu0 0
        %626 = vmatpush2.bf16.xpose.msra.mxu0 0
        %627 = vmatprep.subr.bf16.mxu0 0
        %628 = vmatpush2.bf16.xpose.msra.mxu0 0
        %629 = vmatprep.subr.bf16.mxu0 0
        %630 = vmatpush2.bf16.xpose.msra.mxu0 0
        %631 = vmatprep.subr.bf16.mxu0 0
        %632 = vmatpush2.bf16.xpose.msra.mxu0 0
        %633 = vmatprep.subr.bf16.mxu0 0
        %634 = vmatpush2.bf16.xpose.msra.mxu0 0
        %635 = vmatprep.subr.bf16.mxu0 0
        %636 = vmatpush2.bf16.xpose.msra.mxu0 0
        %637 = vmatprep.subr.bf16.mxu0 0
        %638 = vmatpush2.bf16.xpose.msra.mxu0 0
        %639 = vmatprep.subr.bf16.mxu0 0
        %640 = vmatpush2.bf16.xpose.msra.mxu0 0
        %641 = vmatprep.mubr.bf16.mxu0 0
        %642 = vmatmul.mubr.bf16.gmra.mxu0 %v604
        %v643 = vpop.f32.mrf.mxu0
        %v644 = vadd.f32 0.0, %v643
        %v645 = vpop.f32.mrf.mxu0
        %v646 = vpop.f32.mrf.mxu0
        %v647 = vadd.f32 0.0, %v646
        %v648 = vpop.f32.mrf.mxu0
        %649 = vdwg.mxu0
        %v650 = vsel %vm452, %v644, -inf
        %v651 = vsel %vm453, %v647, -inf
        %v652 = vsel %vm458, %v650, -inf
        %653 = vmax.xlane.f32.xlu0 %v652
        %v654 = vpop.xlane.xlu0 %653
        %v655 = vsel %vm458, %v651, -inf
        %656 = vmax.xlane.f32.xlu0 %v655
        %v657 = vpop.xlane.xlu0 %656
        %v658 = vsel %vm465, %v654, 0.0
        %v659 = vsel %vm466, %v657, 0.0
        %v660 = vsub.f32 %v650, %v658
        %v661 = vsub.f32 %v651, %v659
        %v662 = vmul.f32 %v660, 1.442695
        %v663 = vpow.pop %v662
        %v664 = vmul.f32 %v661, 1.442695
        %v665 = vpow.pop %v664
        %v666 = vsel %vm458, %v663, 0.0
        %667 = vadd.xlane.f32.xlu0 %v666
        %v668 = vpop.xlane.xlu0 %667
        %v669 = vsel %vm458, %v665, 0.0
        %670 = vadd.xlane.f32.xlu0 %v669
        %v671 = vpop.xlane.xlu0 %670
        %vm672 = vcmp.gt.f32.partialorder %v668, 0.0
        %vm673 = vcmp.gt.f32.partialorder %v671, 0.0
        %v674 = vsel %vm672, %v668, 1.0
        %v675 = vsel %vm673, %v671, 1.0
        %v676 = vrcp.pop %v674
        %v677 = vrcp.pop %v675
        %v678 = vmul.f32 %v663, %v676
        %v679 = vmul.f32 %v665, %v677
        %v680 = vpack.c.bf16 %v679, %v678
        %681 = vrot.lane.b32.xlu0 %v467, 56
        %v682 = vpop.permute.xlu0 %681
        %v685 = vsel %vm458, %v680, 0
        %687 = vmatprep.subr.bf16.mxu0 0
        %688 = vmatpush1.bf16.msra.mxu0 0
        %689 = vmatprep.subr.bf16.mxu0 0
        %690 = vmatpush1.bf16.msra.mxu0 0
        %691 = vmatprep.subr.bf16.mxu0 0
        %692 = vmatpush1.bf16.msra.mxu0 0
        %693 = vmatprep.subr.bf16.mxu0 0
        %694 = vmatpush1.bf16.msra.mxu0 0
        %695 = vmatprep.subr.bf16.mxu0 0
        %696 = vmatpush1.bf16.msra.mxu0 0
        %697 = vmatprep.subr.bf16.mxu0 0
        %698 = vmatpush1.bf16.msra.mxu0 0
        %699 = vmatprep.subr.bf16.mxu0 0
        %700 = vmatpush1.bf16.msra.mxu0 0
        %701 = vmatprep.subr.bf16.mxu0 0
        %702 = vmatpush1.bf16.msra.mxu0 %v682
        %703 = vmatprep.subr.bf16.mxu0 0
        %704 = vmatpush2.bf16.msra.mxu0 0
        %705 = vmatprep.subr.bf16.mxu0 0
        %706 = vmatpush2.bf16.msra.mxu0 0
        %707 = vmatprep.subr.bf16.mxu0 0
        %708 = vmatpush2.bf16.msra.mxu0 0
        %709 = vmatprep.subr.bf16.mxu0 0
        %710 = vmatpush2.bf16.msra.mxu0 0
        %711 = vmatprep.subr.bf16.mxu0 0
        %712 = vmatpush2.bf16.msra.mxu0 0
        %713 = vmatprep.subr.bf16.mxu0 0
        %714 = vmatpush2.bf16.msra.mxu0 0
        %715 = vmatprep.subr.bf16.mxu0 0
        %716 = vmatpush2.bf16.msra.mxu0 0
        %717 = vmatprep.subr.bf16.mxu0 0
        %718 = vmatpush2.bf16.msra.mxu0 0
        %719 = vmatprep.mubr.bf16.mxu0 0
        %720 = vmatmul.mubr.bf16.gmra.mxu0 %v685
        %v721 = vpop.f32.mrf.mxu0
        %v722 = vadd.f32 0.0, %v721
        %v723 = vpop.f32.mrf.mxu0
        %v724 = vpop.f32.mrf.mxu0
        %v725 = vadd.f32 0.0, %v724
        %v726 = vpop.f32.mrf.mxu0
        %727 = vdwg.mxu0
        %730 = vrot.lane.b32.xlu0 %v722, 8
        %v731 = vpop.permute.xlu0 %730
        %732 = vrot.lane.b32.xlu0 %v725, 8
        %v733 = vpop.permute.xlu0 %732
        %vm736 = vcmask 130112
        %737 = vst.msk [vmem:[#allocation2] sm:$0xff] %vm736, %v731
        %738 = vst.msk [vmem:[#allocation2 + $0x8] sm:$0xff] %vm736, %v733
        %739 = vrot.lane.b32.xlu0 %v467, 112
        %v740 = vpop.permute.xlu0 %739
        %741 = vrot.lane.b32.xlu0 %v467, 80
        %v742 = vpop.permute.xlu0 %741
        %v744 = vsel %vm471, %v740, 0
        %v747 = vsel %vm471, %v742, 0
        %749 = vmatprep.subr.bf16.mxu0 0
        %750 = vmatpush1.bf16.xpose.msra.mxu0 0
        %751 = vmatprep.subr.bf16.mxu0 0
        %752 = vmatpush1.bf16.xpose.msra.mxu0 0
        %753 = vmatprep.subr.bf16.mxu0 0
        %754 = vmatpush1.bf16.xpose.msra.mxu0 0
        %755 = vmatprep.subr.bf16.mxu0 0
        %756 = vmatpush1.bf16.xpose.msra.mxu0 0
        %757 = vmatprep.subr.bf16.mxu0 0
        %758 = vmatpush1.bf16.xpose.msra.mxu0 0
        %759 = vmatprep.subr.bf16.mxu0 0
        %760 = vmatpush1.bf16.xpose.msra.mxu0 0
        %761 = vmatprep.subr.bf16.mxu0 0
        %762 = vmatpush1.bf16.xpose.msra.mxu0 0
        %763 = vmatprep.subr.bf16.mxu0 0
        %764 = vmatpush1.bf16.xpose.msra.mxu0 %v747
        %765 = vmatprep.subr.bf16.mxu0 0
        %766 = vmatpush2.bf16.xpose.msra.mxu0 0
        %767 = vmatprep.subr.bf16.mxu0 0
        %768 = vmatpush2.bf16.xpose.msra.mxu0 0
        %769 = vmatprep.subr.bf16.mxu0 0
        %770 = vmatpush2.bf16.xpose.msra.mxu0 0
        %771 = vmatprep.subr.bf16.mxu0 0
        %772 = vmatpush2.bf16.xpose.msra.mxu0 0
        %773 = vmatprep.subr.bf16.mxu0 0
        %774 = vmatpush2.bf16.xpose.msra.mxu0 0
        %775 = vmatprep.subr.bf16.mxu0 0
        %776 = vmatpush2.bf16.xpose.msra.mxu0 0
        %777 = vmatprep.subr.bf16.mxu0 0
        %778 = vmatpush2.bf16.xpose.msra.mxu0 0
        %779 = vmatprep.subr.bf16.mxu0 0
        %780 = vmatpush2.bf16.xpose.msra.mxu0 0
        %781 = vmatprep.mubr.bf16.mxu0 0
        %782 = vmatmul.mubr.bf16.gmra.mxu0 %v744
        %v783 = vpop.f32.mrf.mxu0
        %v784 = vadd.f32 0.0, %v783
        %v785 = vpop.f32.mrf.mxu0
        %v786 = vpop.f32.mrf.mxu0
        %v787 = vadd.f32 0.0, %v786
        %v788 = vpop.f32.mrf.mxu0
        %789 = vdwg.mxu0
        %v790 = vsel %vm452, %v784, -inf
        %v791 = vsel %vm453, %v787, -inf
        %v792 = vsel %vm458, %v790, -inf
        %793 = vmax.xlane.f32.xlu0 %v792
        %v794 = vpop.xlane.xlu0 %793
        %v795 = vsel %vm458, %v791, -inf
        %796 = vmax.xlane.f32.xlu0 %v795
        %v797 = vpop.xlane.xlu0 %796
        %v798 = vsel %vm465, %v794, 0.0
        %v799 = vsel %vm466, %v797, 0.0
        %v800 = vsub.f32 %v790, %v798
        %v801 = vsub.f32 %v791, %v799
        %v802 = vmul.f32 %v800, 1.442695
        %v803 = vpow.pop %v802
        %v804 = vmul.f32 %v801, 1.442695
        %v805 = vpow.pop %v804
        %v806 = vsel %vm458, %v803, 0.0
        %807 = vadd.xlane.f32.xlu0 %v806
        %v808 = vpop.xlane.xlu0 %807
        %v809 = vsel %vm458, %v805, 0.0
        %810 = vadd.xlane.f32.xlu0 %v809
        %v811 = vpop.xlane.xlu0 %810
        %vm812 = vcmp.gt.f32.partialorder %v808, 0.0
        %vm813 = vcmp.gt.f32.partialorder %v811, 0.0
        %v814 = vsel %vm812, %v808, 1.0
        %v815 = vsel %vm813, %v811, 1.0
        %v816 = vrcp.pop %v814
        %v817 = vrcp.pop %v815
        %v818 = vmul.f32 %v803, %v816
        %v819 = vmul.f32 %v805, %v817
        %v820 = vpack.c.bf16 %v819, %v818
        %821 = vrot.lane.b32.xlu0 %v467, 48
        %v822 = vpop.permute.xlu0 %821
        %v825 = vsel %vm458, %v820, 0
        %827 = vmatprep.subr.bf16.mxu0 0
        %828 = vmatpush1.bf16.msra.mxu0 0
        %829 = vmatprep.subr.bf16.mxu0 0
        %830 = vmatpush1.bf16.msra.mxu0 0
        %831 = vmatprep.subr.bf16.mxu0 0
        %832 = vmatpush1.bf16.msra.mxu0 0
        %833 = vmatprep.subr.bf16.mxu0 0
        %834 = vmatpush1.bf16.msra.mxu0 0
        %835 = vmatprep.subr.bf16.mxu0 0
        %836 = vmatpush1.bf16.msra.mxu0 0
        %837 = vmatprep.subr.bf16.mxu0 0
        %838 = vmatpush1.bf16.msra.mxu0 0
        %839 = vmatprep.subr.bf16.mxu0 0
        %840 = vmatpush1.bf16.msra.mxu0 0
        %841 = vmatprep.subr.bf16.mxu0 0
        %842 = vmatpush1.bf16.msra.mxu0 %v822
        %843 = vmatprep.subr.bf16.mxu0 0
        %844 = vmatpush2.bf16.msra.mxu0 0
        %845 = vmatprep.subr.bf16.mxu0 0
        %846 = vmatpush2.bf16.msra.mxu0 0
        %847 = vmatprep.subr.bf16.mxu0 0
        %848 = vmatpush2.bf16.msra.mxu0 0
        %849 = vmatprep.subr.bf16.mxu0 0
        %850 = vmatpush2.bf16.msra.mxu0 0
        %851 = vmatprep.subr.bf16.mxu0 0
        %852 = vmatpush2.bf16.msra.mxu0 0
        %853 = vmatprep.subr.bf16.mxu0 0
        %854 = vmatpush2.bf16.msra.mxu0 0
        %855 = vmatprep.subr.bf16.mxu0 0
        %856 = vmatpush2.bf16.msra.mxu0 0
        %857 = vmatprep.subr.bf16.mxu0 0
        %858 = vmatpush2.bf16.msra.mxu0 0
        %859 = vmatprep.mubr.bf16.mxu0 0
        %860 = vmatmul.mubr.bf16.gmra.mxu0 %v825
        %v861 = vpop.f32.mrf.mxu0
        %v862 = vadd.f32 0.0, %v861
        %v863 = vpop.f32.mrf.mxu0
        %v864 = vpop.f32.mrf.mxu0
        %v865 = vadd.f32 0.0, %v864
        %v866 = vpop.f32.mrf.mxu0
        %867 = vdwg.mxu0
        %870 = vrot.lane.b32.xlu0 %v862, 16
        %v871 = vpop.permute.xlu0 %870
        %872 = vrot.lane.b32.xlu0 %v865, 16
        %v873 = vpop.permute.xlu0 %872
        %vm876 = vcmask 195712
        %877 = vst.msk [vmem:[#allocation2] sm:$0xff] %vm876, %v871
        %878 = vst.msk [vmem:[#allocation2 + $0x8] sm:$0xff] %vm876, %v873
        %879 = vrot.lane.b32.xlu0 %v467, 104
        %v880 = vpop.permute.xlu0 %879
        %881 = vrot.lane.b32.xlu0 %v467, 72
        %v882 = vpop.permute.xlu0 %881
        %v884 = vsel %vm471, %v880, 0
        %v887 = vsel %vm471, %v882, 0
        %889 = vmatprep.subr.bf16.mxu0 0
        %890 = vmatpush1.bf16.xpose.msra.mxu0 0
        %891 = vmatprep.subr.bf16.mxu0 0
        %892 = vmatpush1.bf16.xpose.msra.mxu0 0
        %893 = vmatprep.subr.bf16.mxu0 0
        %894 = vmatpush1.bf16.xpose.msra.mxu0 0
        %895 = vmatprep.subr.bf16.mxu0 0
        %896 = vmatpush1.bf16.xpose.msra.mxu0 0
        %897 = vmatprep.subr.bf16.mxu0 0
        %898 = vmatpush1.bf16.xpose.msra.mxu0 0
        %899 = vmatprep.subr.bf16.mxu0 0
        %900 = vmatpush1.bf16.xpose.msra.mxu0 0
        %901 = vmatprep.subr.bf16.mxu0 0
        %902 = vmatpush1.bf16.xpose.msra.mxu0 0
        %903 = vmatprep.subr.bf16.mxu0 0
        %904 = vmatpush1.bf16.xpose.msra.mxu0 %v887
        %905 = vmatprep.subr.bf16.mxu0 0
        %906 = vmatpush2.bf16.xpose.msra.mxu0 0
        %907 = vmatprep.subr.bf16.mxu0 0
        %908 = vmatpush2.bf16.xpose.msra.mxu0 0
        %909 = vmatprep.subr.bf16.mxu0 0
        %910 = vmatpush2.bf16.xpose.msra.mxu0 0
        %911 = vmatprep.subr.bf16.mxu0 0
        %912 = vmatpush2.bf16.xpose.msra.mxu0 0
        %913 = vmatprep.subr.bf16.mxu0 0
        %914 = vmatpush2.bf16.xpose.msra.mxu0 0
        %915 = vmatprep.subr.bf16.mxu0 0
        %916 = vmatpush2.bf16.xpose.msra.mxu0 0
        %917 = vmatprep.subr.bf16.mxu0 0
        %918 = vmatpush2.bf16.xpose.msra.mxu0 0
        %919 = vmatprep.subr.bf16.mxu0 0
        %920 = vmatpush2.bf16.xpose.msra.mxu0 0
        %921 = vmatprep.mubr.bf16.mxu0 0
        %922 = vmatmul.mubr.bf16.gmra.mxu0 %v884
        %v923 = vpop.f32.mrf.mxu0
        %v924 = vadd.f32 0.0, %v923
        %v925 = vpop.f32.mrf.mxu0
        %v926 = vpop.f32.mrf.mxu0
        %v927 = vadd.f32 0.0, %v926
        %v928 = vpop.f32.mrf.mxu0
        %929 = vdwg.mxu0
        %v930 = vsel %vm452, %v924, -inf
        %v931 = vsel %vm453, %v927, -inf
        %v932 = vsel %vm458, %v930, -inf
        %933 = vmax.xlane.f32.xlu0 %v932
        %v934 = vpop.xlane.xlu0 %933
        %v935 = vsel %vm458, %v931, -inf
        %936 = vmax.xlane.f32.xlu0 %v935
        %v937 = vpop.xlane.xlu0 %936
        %v938 = vsel %vm465, %v934, 0.0
        %v939 = vsel %vm466, %v937, 0.0
        %v940 = vsub.f32 %v930, %v938
        %v941 = vsub.f32 %v931, %v939
        %v942 = vmul.f32 %v940, 1.442695
        %v943 = vpow.pop %v942
        %v944 = vmul.f32 %v941, 1.442695
        %v945 = vpow.pop %v944
        %v946 = vsel %vm458, %v943, 0.0
        %947 = vadd.xlane.f32.xlu0 %v946
        %v948 = vpop.xlane.xlu0 %947
        %v949 = vsel %vm458, %v945, 0.0
        %950 = vadd.xlane.f32.xlu0 %v949
        %v951 = vpop.xlane.xlu0 %950
        %vm952 = vcmp.gt.f32.partialorder %v948, 0.0
        %vm953 = vcmp.gt.f32.partialorder %v951, 0.0
        %v954 = vsel %vm952, %v948, 1.0
        %v955 = vsel %vm953, %v951, 1.0
        %v956 = vrcp.pop %v954
        %v957 = vrcp.pop %v955
        %v958 = vmul.f32 %v943, %v956
        %v959 = vmul.f32 %v945, %v957
        %v960 = vpack.c.bf16 %v959, %v958
        %961 = vrot.lane.b32.xlu0 %v467, 40
        %v962 = vpop.permute.xlu0 %961
        %v965 = vsel %vm458, %v960, 0
        %967 = vmatprep.subr.bf16.mxu0 0
        %968 = vmatpush1.bf16.msra.mxu0 0
        %969 = vmatprep.subr.bf16.mxu0 0
        %970 = vmatpush1.bf16.msra.mxu0 0
        %971 = vmatprep.subr.bf16.mxu0 0
        %972 = vmatpush1.bf16.msra.mxu0 0
        %973 = vmatprep.subr.bf16.mxu0 0
        %974 = vmatpush1.bf16.msra.mxu0 0
        %975 = vmatprep.subr.bf16.mxu0 0
        %976 = vmatpush1.bf16.msra.mxu0 0
        %977 = vmatprep.subr.bf16.mxu0 0
        %978 = vmatpush1.bf16.msra.mxu0 0
        %979 = vmatprep.subr.bf16.mxu0 0
        %980 = vmatpush1.bf16.msra.mxu0 0
        %981 = vmatprep.subr.bf16.mxu0 0
        %982 = vmatpush1.bf16.msra.mxu0 %v962
        %983 = vmatprep.subr.bf16.mxu0 0
        %984 = vmatpush2.bf16.msra.mxu0 0
        %985 = vmatprep.subr.bf16.mxu0 0
        %986 = vmatpush2.bf16.msra.mxu0 0
        %987 = vmatprep.subr.bf16.mxu0 0
        %988 = vmatpush2.bf16.msra.mxu0 0
        %989 = vmatprep.subr.bf16.mxu0 0
        %990 = vmatpush2.bf16.msra.mxu0 0
        %991 = vmatprep.subr.bf16.mxu0 0
        %992 = vmatpush2.bf16.msra.mxu0 0
        %993 = vmatprep.subr.bf16.mxu0 0
        %994 = vmatpush2.bf16.msra.mxu0 0
        %995 = vmatprep.subr.bf16.mxu0 0
        %996 = vmatpush2.bf16.msra.mxu0 0
        %997 = vmatprep.subr.bf16.mxu0 0
        %998 = vmatpush2.bf16.msra.mxu0 0
        %999 = vmatprep.mubr.bf16.mxu0 0
        %1000 = vmatmul.mubr.bf16.gmra.mxu0 %v965
        %v1001 = vpop.f32.mrf.mxu0
        %v1002 = vadd.f32 0.0, %v1001
        %v1003 = vpop.f32.mrf.mxu0
        %v1004 = vpop.f32.mrf.mxu0
        %v1005 = vadd.f32 0.0, %v1004
        %v1006 = vpop.f32.mrf.mxu0
        %1007 = vdwg.mxu0
        %1010 = vrot.lane.b32.xlu0 %v1002, 24
        %v1011 = vpop.permute.xlu0 %1010
        %1012 = vrot.lane.b32.xlu0 %v1005, 24
        %v1013 = vpop.permute.xlu0 %1012
        %vm1016 = vcmask 261312
        %1017 = vst.msk [vmem:[#allocation2] sm:$0xff] %vm1016, %v1011
        %1018 = vst.msk [vmem:[#allocation2 + $0x8] sm:$0xff] %vm1016, %v1013
        %v1019 = vld [vmem:[#allocation2] sm:$0xff]
        %v1020 = vld [vmem:[#allocation2 + $0x8] sm:$0xff]
        %v1021 = vpack.c.bf16 %v1020, %v1019
        %v1022 = vld [vmem:[#allocation9] sm:$0xf]
        %v1023 = vld [vmem:[#allocation9 + $0x4] sm:$0xf]
        %v1024 = vld [vmem:[#allocation9 + $0x8] sm:$0xf]
        %v1025 = vld [vmem:[#allocation9 + $0xc] sm:$0xf]
        %v1026 = vld [vmem:[%s5] sm:$0x1]
        %v1028 = vlaneseq
        %v1029 = vshrl.u32 %v1028, 7
        %v1030 = vsub.s32 0, %v1029
        %v1031 = vrot.slane %v1026, %v1030
        %v1037 = vunpack.c.l.b16 %v1022
        %v1038 = vunpack.c.l.b16 %v1023
        %v1039 = vunpack.c.l.b16 %v1024
        %v1040 = vunpack.c.l.b16 %v1025
        %v1041 = vpack.c.b16 %v1038, %v1037
        %v1042 = vpack.c.b16 %v1040, %v1039
        %v1046 = vsel %vm364, %v1021, 0
        %1048 = vmatprep.subr.bf16.mxu0 0
        %1049 = vmatpush1.bf16.msra.mxu0 0
        %1050 = vmatprep.subr.bf16.mxu0 0
        %1051 = vmatpush1.bf16.msra.mxu0 0
        %1052 = vmatprep.subr.bf16.mxu0 0
        %1053 = vmatpush1.bf16.msra.mxu0 0
        %1054 = vmatprep.subr.bf16.mxu0 0
        %1055 = vmatpush1.bf16.msra.mxu0 0
        %1056 = vmatprep.subr.bf16.mxu0 0
        %1057 = vmatpush1.bf16.msra.mxu0 0
        %1058 = vmatprep.subr.bf16.mxu0 0
        %1059 = vmatpush1.bf16.msra.mxu0 0
        %1060 = vmatprep.subr.bf16.mxu0 0
        %1061 = vmatpush1.bf16.msra.mxu0 %v1042
        %1062 = vmatprep.subr.bf16.mxu0 0
        %1063 = vmatpush1.bf16.msra.mxu0 %v1041
        %1064 = vmatprep.subr.bf16.mxu0 0
        %1065 = vmatpush2.bf16.msra.mxu0 0
        %1066 = vmatprep.subr.bf16.mxu0 0
        %1067 = vmatpush2.bf16.msra.mxu0 0
        %1068 = vmatprep.subr.bf16.mxu0 0
        %1069 = vmatpush2.bf16.msra.mxu0 0
        %1070 = vmatprep.subr.bf16.mxu0 0
        %1071 = vmatpush2.bf16.msra.mxu0 0
        %1072 = vmatprep.subr.bf16.mxu0 0
        %1073 = vmatpush2.bf16.msra.mxu0 0
        %1074 = vmatprep.subr.bf16.mxu0 0
        %1075 = vmatpush2.bf16.msra.mxu0 0
        %1076 = vmatprep.subr.bf16.mxu0 0
        %1077 = vmatpush2.bf16.msra.mxu0 0
        %1078 = vmatprep.subr.bf16.mxu0 0
        %1079 = vmatpush2.bf16.msra.mxu0 0
        %1080 = vmatprep.mubr.bf16.mxu0 0
        %1081 = vmatmul.mubr.bf16.gmra.mxu0 %v1046
        %v1082 = vpop.f32.mrf.mxu0
        %v1083 = vadd.f32 %v1031, %v1082
        %v1084 = vpop.f32.mrf.mxu0
        %v1085 = vpop.f32.mrf.mxu0
        %v1086 = vadd.f32 %v1031, %v1085
        %v1087 = vpop.f32.mrf.mxu0
        %1088 = vdwg.mxu0
        %1089 = vst.msk [vmem:[%s332] sm:$0xff] %vm364, %v1083
        %1090 = vst.msk [vmem:[%s332 + $0x8] sm:$0xff] %vm364, %v1086
        %s1091 = sand.u32 %s171, 1
        %s1092 = scalar_lea.sflag [#allocation5], %s1091
        %s1093 = sand.u32 %s171, 1
        %s1094 = smul.addr %s1093, 16
        %s1095 = scalar_lea.vmem [#allocation11], %s1094
        // Predicated region
        $region61: #{tpu_custom_call.1} parent=43 // pred_check
          %p1096 = pneg %p181
        $region62: #{tpu_custom_call.1} parent=43 // pred_check_branch
          %1098 = sbr.rel (%p1096) target = $region64
        $region63: #{tpu_custom_call.1} parent=43 // pred_region
          %s1100 = ssub.s32 256, 256
          %1101 = vsyncadd %s1092, %s1100
          %s1102 = smul.addr %s27, 2
          %s1103 = smul.addr %s1102, 128
          %s1104 = scalar_lea.hbm %s6, %s1103
          %s1105 = sshll.u32 %s1095, 4
          %s1106 = int_to_ptr.vmem [resolvable:$true] %s1105
          %1111 = dma.vmem_to_hbm [thread:$0]  %s1106, 256, %s1104, %s1092, 128, 128, 8
        $region64: #{tpu_custom_call.1} parent=43 // pred_fallthru
          _
      $region44: #{tpu_custom_call.1} parent=5 // pred_fallthru
        _
      %p1112 = scmp.le.s32.totalorder 2, %s22
      // Predicated region
      $region65: #{tpu_custom_call.1} parent=5 // pred_check
        %p1113 = pneg %p1112
      $region66: #{tpu_custom_call.1} parent=5 // pred_check_branch
        %1115 = sbr.rel (%p1113) target = $region68
      $region67: #{tpu_custom_call.1} parent=5 // pred_region
        %s1116 = ssub.s32 %s22, 2
        // Predicated region
        $region69: #{tpu_custom_call.1} parent=67 // pred_check
          %p1117 = pneg %p187
        $region70: #{tpu_custom_call.1} parent=67 // pred_check_branch
          %1119 = sbr.rel (%p1117) target = $region72
        $region71: #{tpu_custom_call.1} parent=67 // pred_region
          %s1120 = sand.u32 %s172, 1
          %s1121 = scalar_lea.sflag [#allocation5], %s1120
          %s1122 = sand.u32 %s172, 1
          %s1123 = smul.addr %s1122, 16
          %s1124 = scalar_lea.vmem [#allocation11], %s1123
          %1125 = dma.done %s1121, 256
        $region72: #{tpu_custom_call.1} parent=67 // pred_fallthru
          _
      $region68: #{tpu_custom_call.1} parent=5 // pred_fallthru
        _
    $region6: #{tpu_custom_call.1} parent=1 // loop_footer
      %s26 = sadd.s32 1, %s22
    $region7: #{tpu_custom_call.1} parent=1 // loop_footer_branch
      %21 = sbr.rel target = $region3
    $region8: #{tpu_custom_call.1} parent=1 // loop_exit
      _
    %1126 = vsyncpa [#allocation4], 1
    %s1127 = scalar_lea.sflag [#allocation4], 1
    %1128 = vsyncpa %s1127, 1
    %1129 = vsyncpa [#allocation7], 1
    %s1130 = scalar_lea.sflag [#allocation7], 1
    %1131 = vsyncpa %s1130, 1
    %1132 = vsyncpa [#allocation10], 1
    %1133 = vsyncpa [#allocation5], 1
    %s1134 = scalar_lea.sflag [#allocation5], 1
    %1135 = vsyncpa %s1134, 1

// kernel: tpu_custom_call.1
$region0: #{tpu_custom_call.1}
  #allocation0 [shape = 'u32[]', space=smem, size = 0x4, offset = 0x4, fixed_abs, tag = 'smem constant byte address 0x4 - core index']
  #allocation1 [shape = 'u32[144,128]{1,0:T(1,128)}', space=vmem, size = 0x12000, scoped, tag = 'internal scratch']
  #allocation2 [shape = 'f32[16,32]{1,0:T(8,128)}', space=vmem, size = 0x2000, scoped, tag = 'scratch operand']
  %s0 = inlined_call_operand.hbm [shape: bf16[2,16,32], index: 0, kind: input, shape index: {}]
  %s1 = inlined_call_operand.hbm [shape: s32[2,1,16], index: 1, kind: input, shape index: {}]
  %s2 = inlined_call_operand.hbm [shape: bf16[32,96], index: 2, kind: input, shape index: {}]
  %s3 = inlined_call_operand.vmem [shape: f32[1,96], index: 3, kind: input, shape index: {}]
  %s4 = inlined_call_operand.hbm [shape: bf16[32,32], index: 4, kind: input, shape index: {}]
  %s5 = inlined_call_operand.vmem [shape: f32[1,32], index: 5, kind: input, shape index: {}]
  %s6 = inlined_call_operand.hbm [shape: f32[2,16,32], index: 6, kind: output, shape index: {}]
  %s7 = sld [smem:[#allocation0]]
  $region73: #{tpu_custom_call.1} parent=0
    _
  %s9 = ssub.s32 1, %s7
  %s10 = scalar_select 0, %s9, %s7
  $region1: #{tpu_custom_call.1} parent=0
    #allocation3 [shape = 'u8[8192]{0}', space=vmem, size = 0x2000, scoped, tag = 'input window, operand 0']
    #allocation4 [shape = 's32[2]{0}', space=sflag, size = 0x8, scoped, tag = 'scoped memory for tpu_custom_call.1']
    #allocation5 [shape = 's32[2]{0}', space=sflag, size = 0x8, scoped, tag = 'scoped memory for tpu_custom_call.1']
    #allocation6 [shape = 'u8[1024]{0}', space=vmem, size = 0x400, scoped, tag = 'input window, operand 1']
    #allocation7 [shape = 's32[2]{0}', space=sflag, size = 0x8, scoped, tag = 'scoped memory for tpu_custom_call.1']
    #allocation8 [shape = 'u8[8192]{0}', space=vmem, size = 0x2000, scoped, tag = 'input window, operand 2, single buffered']
    #allocation9 [shape = 'u8[8192]{0}', space=vmem, size = 0x2000, scoped, tag = 'input window, operand 4, single buffered']
    #allocation10 [shape = 's32[1]{0}', space=sflag, size = 0x4, scoped, tag = 'scoped memory for tpu_custom_call.1']
    #allocation11 [shape = 'u8[16384]{0}', space=vmem, size = 0x4000, scoped, tag = 'output window, operand 0']
    %11 = vsyncpa [#allocation4], 0
    %s12 = scalar_lea.sflag [#allocation4], 1
    %13 = vsyncpa %s12, 0
    %14 = vsyncpa [#allocation7], 0
    %s15 = scalar_lea.sflag [#allocation7], 1
    %16 = vsyncpa %s15, 0
    %17 = vsyncpa [#allocation10], 0
    %18 = vsyncpa [#allocation5], 0
    %s19 = scalar_lea.sflag [#allocation5], 1
    %20 = vsyncpa %s19, 0
    loop: start=0, step=1, limit=4
    $region2: #{tpu_custom_call.1} parent=1 // loop_pre_header
      _
    $region3: #{tpu_custom_call.1} parent=1 // loop_header
      %s22 = sphi 0, %s26
      %p23 = scmp.ge.s32.totalorder %s22, 4
      %s32 = sphi 0, %s34
      %s35 = sphi 0, %s32
      %s36 = sphi 0, %s35
      %s52 = sphi 0, %s36
      %s58 = sphi 0, %s60
      %s61 = sphi 0, %s58
      %s62 = sphi 0, %s61
      %s78 = sphi 0, %s62
      %s82 = sphi 0, %s82
      %s84 = sphi 0, %s82
      %s85 = sphi 0, %s84
      %s99 = sphi 0, %s85
      %s103 = sphi 0, %s103
      %s105 = sphi 0, %s103
      %s106 = sphi 0, %s105
      %s120 = sphi 0, %s106
      %s124 = sphi 0, %s124
      %s126 = sphi 0, %s124
      %s127 = sphi 0, %s126
      %s141 = sphi 0, %s127
      %s145 = sphi 0, %s145
      %s147 = sphi 0, %s145
      %s148 = sphi 0, %s147
      %s162 = sphi 0, %s148
      %s168 = sphi 0, %s170
      %s171 = sphi 0, %s168
      %s172 = sphi 0, %s171
      %s188 = sphi 0, %s172
    $region4: #{tpu_custom_call.1} parent=1 // loop_header_branch
      %25 = sbr.rel (%p23) target = $region8
    $region5: #{tpu_custom_call.1} parent=1 // loop_body
      %s27 = ssub.s32 %s22, 1
      %s28 = ssub.s32 %s22, 2
      %s29 = sadd.s32 %s22, 1
      %s30 = ssub.s32 %s22, %s29
      %p31 = scmp.eq.s32.totalorder %s30, 0
      %s33 = sadd.s32 %s32, 1
      %s34 = scalar_select %p31, %s32, %s33
      %p37 = pneg %p31
      %p38 = scmp.eq.s32.totalorder %s22, 1
      %p39 = por %p37, %p38
      %p40 = scmp.ne.s32.totalorder %s32, %s35
      %p41 = scmp.eq.s32.totalorder %s22, 0
      %p42 = por %p40, %p41
      %p43 = scmp.ne.s32.totalorder %s32, %s35
      %p44 = scmp.eq.s32.totalorder %s27, 1
      %p45 = por %p43, %p44
      %p46 = scmp.ne.s32.totalorder %s35, %s36
      %p47 = scmp.eq.s32.totalorder %s27, 0
      %p48 = por %p46, %p47
      %p49 = scmp.ne.s32.totalorder %s35, %s36
      %p50 = scmp.eq.s32.totalorder %s28, 1
      %p51 = por %p49, %p50
      %p53 = scmp.ne.s32.totalorder %s36, %s52
      %p54 = scmp.eq.s32.totalorder %s28, 0
      %p55 = por %p53, %p54
      %s56 = ssub.s32 %s22, %s29
      %p57 = scmp.eq.s32.totalorder %s56, 0
      %s59 = sadd.s32 %s58, 1
      %s60 = scalar_select %p57, %s58, %s59
      %p63 = pneg %p57
      %p64 = scmp.eq.s32.totalorder %s22, 1
      %p65 = por %p63, %p64
      %p66 = scmp.ne.s32.totalorder %s58, %s61
      %p67 = scmp.eq.s32.totalorder %s22, 0
      %p68 = por %p66, %p67
      %p69 = scmp.ne.s32.totalorder %s58, %s61
      %p70 = scmp.eq.s32.totalorder %s27, 1
      %p71 = por %p69, %p70
      %p72 = scmp.ne.s32.totalorder %s61, %s62
      %p73 = scmp.eq.s32.totalorder %s27, 0
      %p74 = por %p72, %p73
      %p75 = scmp.ne.s32.totalorder %s61, %s62
      %p76 = scmp.eq.s32.totalorder %s28, 1
      %p77 = por %p75, %p76
      %p79 = scmp.ne.s32.totalorder %s62, %s78
      %p80 = scmp.eq.s32.totalorder %s28, 0
      %p81 = por %p79, %p80
      %s83 = sadd.s32 %s82, 1
      %p86 = scmp.eq.s32.totalorder %s22, 1
      %p87 = scmp.ne.s32.totalorder %s82, %s84
      %p88 = scmp.eq.s32.totalorder %s22, 0
      %p89 = por %p87, %p88
      %p90 = scmp.ne.s32.totalorder %s82, %s84
      %p91 = scmp.eq.s32.totalorder %s27, 1
      %p92 = por %p90, %p91
      %p93 = scmp.ne.s32.totalorder %s84, %s85
      %p94 = scmp.eq.s32.totalorder %s27, 0
      %p95 = por %p93, %p94
      %p96 = scmp.ne.s32.totalorder %s84, %s85
      %p97 = scmp.eq.s32.totalorder %s28, 1
      %p98 = por %p96, %p97
      %p100 = scmp.ne.s32.totalorder %s85, %s99
      %p101 = scmp.eq.s32.totalorder %s28, 0
      %p102 = por %p100, %p101
      %s104 = sadd.s32 %s103, 1
      %p107 = scmp.eq.s32.totalorder %s22, 1
      %p108 = scmp.ne.s32.totalorder %s103, %s105
      %p109 = scmp.eq.s32.totalorder %s22, 0
      %p110 = por %p108, %p109
      %p111 = scmp.ne.s32.totalorder %s103, %s105
      %p112 = scmp.eq.s32.totalorder %s27, 1
      %p113 = por %p111, %p112
      %p114 = scmp.ne.s32.totalorder %s105, %s106
      %p115 = scmp.eq.s32.totalorder %s27, 0
      %p116 = por %p114, %p115
      %p117 = scmp.ne.s32.totalorder %s105, %s106
      %p118 = scmp.eq.s32.totalorder %s28, 1
      %p119 = por %p117, %p118
      %p121 = scmp.ne.s32.totalorder %s106, %s120
      %p122 = scmp.eq.s32.totalorder %s28, 0
      %p123 = por %p121, %p122
      %s125 = sadd.s32 %s124, 1
      %p128 = scmp.eq.s32.totalorder %s22, 1
      %p129 = scmp.ne.s32.totalorder %s124, %s126
      %p130 = scmp.eq.s32.totalorder %s22, 0
      %p131 = por %p129, %p130
      %p132 = scmp.ne.s32.totalorder %s124, %s126
      %p133 = scmp.eq.s32.totalorder %s27, 1
      %p134 = por %p132, %p133
      %p135 = scmp.ne.s32.totalorder %s126, %s127
      %p136 = scmp.eq.s32.totalorder %s27, 0
      %p137 = por %p135, %p136
      %p138 = scmp.ne.s32.totalorder %s126, %s127
      %p139 = scmp.eq.s32.totalorder %s28, 1
      %p140 = por %p138, %p139
      %p142 = scmp.ne.s32.totalorder %s127, %s141
      %p143 = scmp.eq.s32.totalorder %s28, 0
      %p144 = por %p142, %p143
      %s146 = sadd.s32 %s145, 1
      %p149 = scmp.eq.s32.totalorder %s22, 1
      %p150 = scmp.ne.s32.totalorder %s145, %s147
      %p151 = scmp.eq.s32.totalorder %s22, 0
      %p152 = por %p150, %p151
      %p153 = scmp.ne.s32.totalorder %s145, %s147
      %p154 = scmp.eq.s32.totalorder %s27, 1
      %p155 = por %p153, %p154
      %p156 = scmp.ne.s32.totalorder %s147, %s148
      %p157 = scmp.eq.s32.totalorder %s27, 0
      %p158 = por %p156, %p157
      %p159 = scmp.ne.s32.totalorder %s147, %s148
      %p160 = scmp.eq.s32.totalorder %s28, 1
      %p161 = por %p159, %p160
      %p163 = scmp.ne.s32.totalorder %s148, %s162
      %p164 = scmp.eq.s32.totalorder %s28, 0
      %p165 = por %p163, %p164
      %s166 = ssub.s32 %s22, %s29
      %p167 = scmp.eq.s32.totalorder %s166, 0
      %s169 = sadd.s32 %s168, 1
      %s170 = scalar_select %p167, %s168, %s169
      %p173 = pneg %p167
      %p174 = scmp.eq.s32.totalorder %s22, 1
      %p175 = por %p173, %p174
      %p176 = scmp.ne.s32.totalorder %s168, %s171
      %p177 = scmp.eq.s32.totalorder %s22, 0
      %p178 = por %p176, %p177
      %p179 = scmp.ne.s32.totalorder %s168, %s171
      %p180 = scmp.eq.s32.totalorder %s27, 1
      %p181 = por %p179, %p180
      %p182 = scmp.ne.s32.totalorder %s171, %s172
      %p183 = scmp.eq.s32.totalorder %s27, 0
      %p184 = por %p182, %p183
      %p185 = scmp.ne.s32.totalorder %s171, %s172
      %p186 = scmp.eq.s32.totalorder %s28, 1
      %p187 = por %p185, %p186
      %p189 = scmp.ne.s32.totalorder %s172, %s188
      %p190 = scmp.eq.s32.totalorder %s28, 0
      %p191 = por %p189, %p190
      %p192 = scmp.le.s32.totalorder 1, %s22
      %p193 = scmp.lt.s32.totalorder %s22, 3
      %p194 = pnand %p192, %p193
      %p195 = pneg %p194
      // Predicated region
      $region9: #{tpu_custom_call.1} parent=5 // pred_check
        _
      $region10: #{tpu_custom_call.1} parent=5 // pred_check_branch
        %197 = sbr.rel (%p194) target = $region12
      $region11: #{tpu_custom_call.1} parent=5 // pred_region
        %s198 = ssub.s32 %s22, 1
        // Predicated region
        $region13: #{tpu_custom_call.1} parent=11 // pred_check
          %p199 = pneg %p95
        $region14: #{tpu_custom_call.1} parent=11 // pred_check_branch
          %201 = sbr.rel (%p199) target = $region16
        $region15: #{tpu_custom_call.1} parent=11 // pred_region
          %s203 = ssub.s32 256, 256
          %204 = vsyncadd [#allocation7], %s203
          %s205 = sshll.u32 [#allocation8], 4
          %s206 = int_to_ptr.vmem [resolvable:$true] %s205
          %211 = dma.hbm_to_vmem [thread:$0]  %s2, 256, %s206, [#allocation7], 64, 64, 4
        $region16: #{tpu_custom_call.1} parent=11 // pred_fallthru
          _
        // Predicated region
        $region17: #{tpu_custom_call.1} parent=11 // pred_check
          %p212 = pneg %p116
        $region18: #{tpu_custom_call.1} parent=11 // pred_check_branch
          %214 = sbr.rel (%p212) target = $region20
        $region19: #{tpu_custom_call.1} parent=11 // pred_region
          _
        $region20: #{tpu_custom_call.1} parent=11 // pred_fallthru
          _
        // Predicated region
        $region21: #{tpu_custom_call.1} parent=11 // pred_check
          %p215 = pneg %p137
        $region22: #{tpu_custom_call.1} parent=11 // pred_check_branch
          %217 = sbr.rel (%p215) target = $region24
        $region23: #{tpu_custom_call.1} parent=11 // pred_region
          %s219 = ssub.s32 256, 256
          %220 = vsyncadd [#allocation10], %s219
          %s221 = sshll.u32 [#allocation9], 4
          %s222 = int_to_ptr.vmem [resolvable:$true] %s221
          %227 = dma.hbm_to_vmem [thread:$0]  %s4, 256, %s222, [#allocation10], 64, 64, 4
        $region24: #{tpu_custom_call.1} parent=11 // pred_fallthru
          _
        // Predicated region
        $region25: #{tpu_custom_call.1} parent=11 // pred_check
          %p228 = pneg %p158
        $region26: #{tpu_custom_call.1} parent=11 // pred_check_branch
          %230 = sbr.rel (%p228) target = $region28
        $region27: #{tpu_custom_call.1} parent=11 // pred_region
          _
        $region28: #{tpu_custom_call.1} parent=11 // pred_fallthru
          _
      $region12: #{tpu_custom_call.1} parent=5 // pred_fallthru
        _
      %p231 = scmp.lt.s32.totalorder %s22, 2
      // Predicated region
      $region29: #{tpu_custom_call.1} parent=5 // pred_check
        %p232 = pneg %p231
      $region30: #{tpu_custom_call.1} parent=5 // pred_check_branch
        %234 = sbr.rel (%p232) target = $region32
      $region31: #{tpu_custom_call.1} parent=5 // pred_region
        // Predicated region
        $region33: #{tpu_custom_call.1} parent=31 // pred_check
          %p235 = pneg %p42
        $region34: #{tpu_custom_call.1} parent=31 // pred_check_branch
          %237 = sbr.rel (%p235) target = $region36
        $region35: #{tpu_custom_call.1} parent=31 // pred_region
          %s238 = sand.u32 %s32, 1
          %s239 = scalar_lea.sflag [#allocation4], %s238
          %s240 = sand.u32 %s32, 1
          %s241 = smul.addr %s240, 8
          %s242 = scalar_lea.vmem [#allocation3], %s241
          %s244 = ssub.s32 128, 128
          %245 = vsyncadd %s239, %s244
          %s246 = smul.addr %s22, 2
          %s247 = smul.addr %s246, 64
          %s248 = scalar_lea.hbm %s0, %s247
          %s249 = sshll.u32 %s242, 4
          %s250 = int_to_ptr.vmem [resolvable:$true] %s249
          %255 = dma.hbm_to_vmem [thread:$0]  %s248, 128, %s250, %s239, 64, 64, 4
        $region36: #{tpu_custom_call.1} parent=31 // pred_fallthru
          _
        // Predicated region
        $region37: #{tpu_custom_call.1} parent=31 // pred_check
          %p256 = pneg %p68
        $region38: #{tpu_custom_call.1} parent=31 // pred_check_branch
          %258 = sbr.rel (%p256) target = $region40
        $region39: #{tpu_custom_call.1} parent=31 // pred_region
          %s259 = sand.u32 %s22, 1
          %s260 = scalar_lea.sflag [#allocation7], %s259
          %s261 = sand.u32 %s58, 1
          %s262 = scalar_lea.vmem [#allocation6], %s261
          %s264 = ssub.s32 16, 16
          %265 = vsyncadd %s260, %s264
          %s266 = smul.addr %s22, 16
          %s267 = scalar_lea.hbm %s1, %s266
          %s269 = sshll.u32 %s262, 4
          %s270 = int_to_ptr.vmem [resolvable:$true] %s269
          %272 = dma.hbm_to_vmem [thread:$0]  %s267, 16, %s270, %s260
        $region40: #{tpu_custom_call.1} parent=31 // pred_fallthru
          _
      $region32: #{tpu_custom_call.1} parent=5 // pred_fallthru
        _
      %p273 = scmp.le.s32.totalorder 1, %s22
      %p274 = scmp.lt.s32.totalorder %s22, 3
      %p275 = pnand %p273, %p274
      %p276 = pneg %p275
      // Predicated region
      $region41: #{tpu_custom_call.1} parent=5 // pred_check
        _
      $region42: #{tpu_custom_call.1} parent=5 // pred_check_branch
        %278 = sbr.rel (%p275) target = $region44
      $region43: #{tpu_custom_call.1} parent=5 // pred_region
        %s279 = ssub.s32 %s22, 1
        %s280 = sand.u32 %s35, 1
        %s281 = scalar_lea.sflag [#allocation4], %s280
        %s282 = sand.u32 %s35, 1
        %s283 = smul.addr %s282, 8
        %s284 = scalar_lea.vmem [#allocation3], %s283
        // Predicated region
        $region45: #{tpu_custom_call.1} parent=43 // pred_check
          %p285 = pneg %p48
        $region46: #{tpu_custom_call.1} parent=43 // pred_check_branch
          %287 = sbr.rel (%p285) target = $region48
        $region47: #{tpu_custom_call.1} parent=43 // pred_region
          %288 = dma.done %s281, 128
        $region48: #{tpu_custom_call.1} parent=43 // pred_fallthru
          _
        %s289 = sand.u32 %s27, 1
        %s290 = scalar_lea.sflag [#allocation7], %s289
        %s291 = sand.u32 %s61, 1
        %s292 = scalar_lea.vmem [#allocation6], %s291
        // Predicated region
        $region49: #{tpu_custom_call.1} parent=43 // pred_check
          %p293 = pneg %p74
        $region50: #{tpu_custom_call.1} parent=43 // pred_check_branch
          %295 = sbr.rel (%p293) target = $region52
        $region51: #{tpu_custom_call.1} parent=43 // pred_region
          %296 = dma.done %s290, 16
        $region52: #{tpu_custom_call.1} parent=43 // pred_fallthru
          _
        // Predicated region
        $region53: #{tpu_custom_call.1} parent=43 // pred_check
          %p297 = pneg %p95
        $region54: #{tpu_custom_call.1} parent=43 // pred_check_branch
          %299 = sbr.rel (%p297) target = $region56
        $region55: #{tpu_custom_call.1} parent=43 // pred_region
          %300 = dma.done [#allocation7], 256
        $region56: #{tpu_custom_call.1} parent=43 // pred_fallthru
          _
        // Predicated region
        $region57: #{tpu_custom_call.1} parent=43 // pred_check
          %p301 = pneg %p137
        $region58: #{tpu_custom_call.1} parent=43 // pred_check_branch
          %303 = sbr.rel (%p301) target = $region60
        $region59: #{tpu_custom_call.1} parent=43 // pred_region
          %304 = dma.done [#allocation10], 256
        $region60: #{tpu_custom_call.1} parent=43 // pred_fallthru
          _
        %s305 = sand.u32 %s35, 1
        %s306 = scalar_lea.sflag [#allocation4], %s305
        %s307 = sand.u32 %s35, 1
        %s308 = smul.addr %s307, 8
        %s309 = scalar_lea.vmem [#allocation3], %s308
        %p310 = pneg %p48
        %p311 = pneg %p45
        %s312 = sand.u32 %s27, 1
        %s313 = scalar_lea.sflag [#allocation7], %s312
        %s314 = sand.u32 %s61, 1
        %s315 = scalar_lea.vmem [#allocation6], %s314
        %p316 = pneg %p74
        %p317 = pneg %p71
        %p318 = pneg %p95
        %p319 = pneg %p92
        %p320 = pneg %p116
        %p321 = pneg %p113
        %p322 = pneg %p137
        %p323 = pneg %p134
        %p324 = pneg %p158
        %p325 = pneg %p155
        %p326 = pneg %p184
        %p327 = pneg %p181
        %s328 = sand.u32 %s171, 1
        %s329 = scalar_lea.sflag [#allocation5], %s328
        %s330 = sand.u32 %s171, 1
        %s331 = smul.addr %s330, 16
        %s332 = scalar_lea.vmem [#allocation11], %s331
        %v334 = vld [vmem:[%s284] sm:$0xf]
        %v335 = vld [vmem:[%s284 + $0x4] sm:$0xf]
        %v336 = vld [vmem:[#allocation8] sm:$0xf]
        %v337 = vld [vmem:[#allocation8 + $0x4] sm:$0xf]
        %v338 = vld [vmem:[#allocation8 + $0x8] sm:$0xf]
        %v339 = vld [vmem:[#allocation8 + $0xc] sm:$0xf]
        %v340 = vld [vmem:[%s3] sm:$0x1]
        %v342 = vlaneseq
        %v343 = vshrl.u32 %v342, 7
        %v344 = vsub.s32 0, %v343
        %v345 = vrot.slane %v340, %v344
        %v349 = vunpack.c.l.b16 %v334
        %v350 = vunpack.c.l.b16 %v335
        %v351 = vpack.c.b16 %v350, %v349
        %v356 = vunpack.c.l.b16 %v336
        %v357 = vunpack.c.l.b16 %v337
        %v358 = vunpack.c.l.b16 %v338
        %v359 = vunpack.c.l.b16 %v339
        %v360 = vpack.c.b16 %v357, %v356
        %v361 = vpack.c.b16 %v359, %v358
        %vm364 = vcmask 261120
        %v366 = vsel %vm364, %v351, 0
        %368 = vmatprep.subr.bf16.mxu0 0
        %369 = vmatpush1.bf16.msra.mxu0 0
        %370 = vmatprep.subr.bf16.mxu0 0
        %371 = vmatpush1.bf16.msra.mxu0 0
        %372 = vmatprep.subr.bf16.mxu0 0
        %373 = vmatpush1.bf16.msra.mxu0 0
        %374 = vmatprep.subr.bf16.mxu0 0
        %375 = vmatpush1.bf16.msra.mxu0 0
        %376 = vmatprep.subr.bf16.mxu0 0
        %377 = vmatpush1.bf16.msra.mxu0 0
        %378 = vmatprep.subr.bf16.mxu0 0
        %379 = vmatpush1.bf16.msra.mxu0 0
        %380 = vmatprep.subr.bf16.mxu0 0
        %381 = vmatpush1.bf16.msra.mxu0 %v361
        %382 = vmatprep.subr.bf16.mxu0 0
        %383 = vmatpush1.bf16.msra.mxu0 %v360
        %384 = vmatprep.subr.bf16.mxu0 0
        %385 = vmatpush2.bf16.msra.mxu0 0
        %386 = vmatprep.subr.bf16.mxu0 0
        %387 = vmatpush2.bf16.msra.mxu0 0
        %388 = vmatprep.subr.bf16.mxu0 0
        %389 = vmatpush2.bf16.msra.mxu0 0
        %390 = vmatprep.subr.bf16.mxu0 0
        %391 = vmatpush2.bf16.msra.mxu0 0
        %392 = vmatprep.subr.bf16.mxu0 0
        %393 = vmatpush2.bf16.msra.mxu0 0
        %394 = vmatprep.subr.bf16.mxu0 0
        %395 = vmatpush2.bf16.msra.mxu0 0
        %396 = vmatprep.subr.bf16.mxu0 0
        %397 = vmatpush2.bf16.msra.mxu0 0
        %398 = vmatprep.subr.bf16.mxu0 0
        %399 = vmatpush2.bf16.msra.mxu0 0
        %400 = vmatprep.mubr.bf16.mxu0 0
        %401 = vmatmul.mubr.bf16.gmra.mxu0 %v366
        %v402 = vpop.f32.mrf.mxu0
        %v403 = vadd.f32 %v345, %v402
        %v404 = vpop.f32.mrf.mxu0
        %v405 = vpop.f32.mrf.mxu0
        %v406 = vadd.f32 %v345, %v405
        %v407 = vpop.f32.mrf.mxu0
        %408 = vdwg.mxu0
        %v409 = vld [vmem:[%s292] sm:$0x1]
        %v410 = vcvt.s32.f32 %v409
        %v412 = vlaneseq
        %v413 = vshrl.u32 %v412, 7
        %v414 = vsub.s32 0, %v413
        %v415 = vrot.slane %v410, %v414
        %417 = vxpose.xlu0.b32.start [1/16] %v415, 128
        %418 = vxpose.xlu0.b32.cont [2/16] %v415, 128
        %419 = vxpose.xlu0.b32.cont [3/16] 0.0, 128
        %420 = vxpose.xlu0.b32.cont [4/16] 0.0, 128
        %421 = vxpose.xlu0.b32.cont [5/16] 0.0, 128
        %422 = vxpose.xlu0.b32.cont [6/16] 0.0, 128
        %423 = vxpose.xlu0.b32.cont [7/16] 0.0, 128
        %424 = vxpose.xlu0.b32.cont [8/16] 0.0, 128
        %425 = vxpose.xlu0.b32.cont [9/16] 0.0, 128
        %426 = vxpose.xlu0.b32.cont [10/16] 0.0, 128
        %427 = vxpose.xlu0.b32.cont [11/16] 0.0, 128
        %428 = vxpose.xlu0.b32.cont [12/16] 0.0, 128
        %429 = vxpose.xlu0.b32.cont [13/16] 0.0, 128
        %430 = vxpose.xlu0.b32.cont [14/16] 0.0, 128
        %431 = vxpose.xlu0.b32.cont [15/16] 0.0, 128
        %432 = vxpose.xlu0.b32.end [16/16] 0.0, 128
        %v433 = vpop.trf.xlu0
        %v434 = vpop.trf.xlu0
        %v435 = vpop.trf.xlu0
        %v436 = vpop.trf.xlu0
        %v437 = vpop.trf.xlu0
        %v438 = vpop.trf.xlu0
        %v439 = vpop.trf.xlu0
        %v440 = vpop.trf.xlu0
        %v441 = vpop.trf.xlu0
        %v442 = vpop.trf.xlu0
        %v443 = vpop.trf.xlu0
        %v444 = vpop.trf.xlu0
        %v445 = vpop.trf.xlu0
        %v446 = vpop.trf.xlu0
        %v447 = vpop.trf.xlu0
        %v448 = vpop.trf.xlu0
        %vm449 = vcmp.eq.f32.partialorder %v415, %v433
        %vm450 = vcmp.eq.f32.partialorder %v415, %v434
        %vm451 = vcmp.ge.f32.partialorder %v415, 0.0
        %vm452 = vmand %vm449, %vm451
        %vm453 = vmand %vm450, %vm451
        %v454 = vsel %vm452, 1, 0
        %v455 = vsel %vm453, 1, 0
        %v456 = vcvt.s32.f32 %v454
        %v457 = vcvt.s32.f32 %v455
        %vm458 = vcmask 130048
        %v459 = vsel %vm458, %v456, 0.0
        %460 = vadd.xlane.f32.xlu0 %v459
        %v461 = vpop.xlane.xlu0 %460
        %v462 = vsel %vm458, %v457, 0.0
        %463 = vadd.xlane.f32.xlu0 %v462
        %v464 = vpop.xlane.xlu0 %463
        %vm465 = vcmp.gt.f32.partialorder %v461, 0.0
        %vm466 = vcmp.gt.f32.partialorder %v464, 0.0
        %v467 = vpack.c.bf16 %v406, %v403
        %469 = vrot.lane.b32.xlu0 %v467, 96
        %v470 = vpop.permute.xlu0 %469
        %vm471 = vcmask 64512
        %v473 = vsel %vm471, %v467, 0
        %v476 = vsel %vm471, %v470, 0
        %478 = vmatprep.subr.bf16.mxu0 0
        %479 = vmatpush1.bf16.xpose.msra.mxu0 0
        %480 = vmatprep.subr.bf16.mxu0 0
        %481 = vmatpush1.bf16.xpose.msra.mxu0 0
        %482 = vmatprep.subr.bf16.mxu0 0
        %483 = vmatpush1.bf16.xpose.msra.mxu0 0
        %484 = vmatprep.subr.bf16.mxu0 0
        %485 = vmatpush1.bf16.xpose.msra.mxu0 0
        %486 = vmatprep.subr.bf16.mxu0 0
        %487 = vmatpush1.bf16.xpose.msra.mxu0 0
        %488 = vmatprep.subr.bf16.mxu0 0
        %489 = vmatpush1.bf16.xpose.msra.mxu0 0
        %490 = vmatprep.subr.bf16.mxu0 0
        %491 = vmatpush1.bf16.xpose.msra.mxu0 0
        %492 = vmatprep.subr.bf16.mxu0 0
        %493 = vmatpush1.bf16.xpose.msra.mxu0 %v476
        %494 = vmatprep.subr.bf16.mxu0 0
        %495 = vmatpush2.bf16.xpose.msra.mxu0 0
        %496 = vmatprep.subr.bf16.mxu0 0
        %497 = vmatpush2.bf16.xpose.msra.mxu0 0
        %498 = vmatprep.subr.bf16.mxu0 0
        %499 = vmatpush2.bf16.xpose.msra.mxu0 0
        %500 = vmatprep.subr.bf16.mxu0 0
        %501 = vmatpush2.bf16.xpose.msra.mxu0 0
        %502 = vmatprep.subr.bf16.mxu0 0
        %503 = vmatpush2.bf16.xpose.msra.mxu0 0
        %504 = vmatprep.subr.bf16.mxu0 0
        %505 = vmatpush2.bf16.xpose.msra.mxu0 0
        %506 = vmatprep.subr.bf16.mxu0 0
        %507 = vmatpush2.bf16.xpose.msra.mxu0 0
        %508 = vmatprep.subr.bf16.mxu0 0
        %509 = vmatpush2.bf16.xpose.msra.mxu0 0
        %510 = vmatprep.mubr.bf16.mxu0 0
        %511 = vmatmul.mubr.bf16.gmra.mxu0 %v473
        %v512 = vpop.f32.mrf.mxu0
        %v513 = vadd.f32 0.0, %v512
        %v514 = vpop.f32.mrf.mxu0
        %v515 = vpop.f32.mrf.mxu0
        %v516 = vadd.f32 0.0, %v515
        %v517 = vpop.f32.mrf.mxu0
        %518 = vdwg.mxu0
        %v519 = vsel %vm452, %v513, -inf
        %v520 = vsel %vm453, %v516, -inf
        %v521 = vsel %vm458, %v519, -inf
        %522 = vmax.xlane.f32.xlu0 %v521
        %v523 = vpop.xlane.xlu0 %522
        %v524 = vsel %vm458, %v520, -inf
        %525 = vmax.xlane.f32.xlu0 %v524
        %v526 = vpop.xlane.xlu0 %525
        %v527 = vsel %vm465, %v523, 0.0
        %v528 = vsel %vm466, %v526, 0.0
        %v529 = vsub.f32 %v519, %v527
        %v530 = vsub.f32 %v520, %v528
        %v531 = vmul.f32 %v529, 1.442695
        %v532 = vpow.pop %v531
        %v533 = vmul.f32 %v530, 1.442695
        %v534 = vpow.pop %v533
        %v535 = vsel %vm458, %v532, 0.0
        %536 = vadd.xlane.f32.xlu0 %v535
        %v537 = vpop.xlane.xlu0 %536
        %v538 = vsel %vm458, %v534, 0.0
        %539 = vadd.xlane.f32.xlu0 %v538
        %v540 = vpop.xlane.xlu0 %539
        %vm541 = vcmp.gt.f32.partialorder %v537, 0.0
        %vm542 = vcmp.gt.f32.partialorder %v540, 0.0
        %v543 = vsel %vm541, %v537, 1.0
        %v544 = vsel %vm542, %v540, 1.0
        %v545 = vrcp.pop %v543
        %v546 = vrcp.pop %v544
        %v547 = vmul.f32 %v532, %v545
        %v548 = vmul.f32 %v534, %v546
        %v549 = vpack.c.bf16 %v548, %v547
        %550 = vrot.lane.b32.xlu0 %v467, 64
        %v551 = vpop.permute.xlu0 %550
        %v554 = vsel %vm458, %v549, 0
        %556 = vmatprep.subr.bf16.mxu0 0
        %557 = vmatpush1.bf16.msra.mxu0 0
        %558 = vmatprep.subr.bf16.mxu0 0
        %559 = vmatpush1.bf16.msra.mxu0 0
        %560 = vmatprep.subr.bf16.mxu0 0
        %561 = vmatpush1.bf16.msra.mxu0 0
        %562 = vmatprep.subr.bf16.mxu0 0
        %563 = vmatpush1.bf16.msra.mxu0 0
        %564 = vmatprep.subr.bf16.mxu0 0
        %565 = vmatpush1.bf16.msra.mxu0 0
        %566 = vmatprep.subr.bf16.mxu0 0
        %567 = vmatpush1.bf16.msra.mxu0 0
        %568 = vmatprep.subr.bf16.mxu0 0
        %569 = vmatpush1.bf16.msra.mxu0 0
        %570 = vmatprep.subr.bf16.mxu0 0
        %571 = vmatpush1.bf16.msra.mxu0 %v551
        %572 = vmatprep.subr.bf16.mxu0 0
        %573 = vmatpush2.bf16.msra.mxu0 0
        %574 = vmatprep.subr.bf16.mxu0 0
        %575 = vmatpush2.bf16.msra.mxu0 0
        %576 = vmatprep.subr.bf16.mxu0 0
        %577 = vmatpush2.bf16.msra.mxu0 0
        %578 = vmatprep.subr.bf16.mxu0 0
        %579 = vmatpush2.bf16.msra.mxu0 0
        %580 = vmatprep.subr.bf16.mxu0 0
        %581 = vmatpush2.bf16.msra.mxu0 0
        %582 = vmatprep.subr.bf16.mxu0 0
        %583 = vmatpush2.bf16.msra.mxu0 0
        %584 = vmatprep.subr.bf16.mxu0 0
        %585 = vmatpush2.bf16.msra.mxu0 0
        %586 = vmatprep.subr.bf16.mxu0 0
        %587 = vmatpush2.bf16.msra.mxu0 0
        %588 = vmatprep.mubr.bf16.mxu0 0
        %589 = vmatmul.mubr.bf16.gmra.mxu0 %v554
        %v590 = vpop.f32.mrf.mxu0
        %v591 = vadd.f32 0.0, %v590
        %v592 = vpop.f32.mrf.mxu0
        %v593 = vpop.f32.mrf.mxu0
        %v594 = vadd.f32 0.0, %v593
        %v595 = vpop.f32.mrf.mxu0
        %596 = vdwg.mxu0
        %597 = vst.msk [vmem:[#allocation2] sm:$0xff] %vm471, %v591
        %598 = vst.msk [vmem:[#allocation2 + $0x8] sm:$0xff] %vm471, %v594
        %599 = vrot.lane.b32.xlu0 %v467, 120
        %v600 = vpop.permute.xlu0 %599
        %601 = vrot.lane.b32.xlu0 %v467, 88
        %v602 = vpop.permute.xlu0 %601
        %v604 = vsel %vm471, %v600, 0
        %v607 = vsel %vm471, %v602, 0
        %609 = vmatprep.subr.bf16.mxu0 0
        %610 = vmatpush1.bf16.xpose.msra.mxu0 0
        %611 = vmatprep.subr.bf16.mxu0 0
        %612 = vmatpush1.bf16.xpose.msra.mxu0 0
        %613 = vmatprep.subr.bf16.mxu0 0
        %614 = vmatpush1.bf16.xpose.msra.mxu0 0
        %615 = vmatprep.subr.bf16.mxu0 0
        %616 = vmatpush1.bf16.xpose.msra.mxu0 0
        %617 = vmatprep.subr.bf16.mxu0 0
        %618 = vmatpush1.bf16.xpose.msra.mxu0 0
        %619 = vmatprep.subr.bf16.mxu0 0
        %620 = vmatpush1.bf16.xpose.msra.mxu0 0
        %621 = vmatprep.subr.bf16.mxu0 0
        %622 = vmatpush1.bf16.xpose.msra.mxu0 0
        %623 = vmatprep.subr.bf16.mxu0 0
        %624 = vmatpush1.bf16.xpose.msra.mxu0 %v607
        %625 = vmatprep.subr.bf16.mxu0 0
        %626 = vmatpush2.bf16.xpose.msra.mxu0 0
        %627 = vmatprep.subr.bf16.mxu0 0
        %628 = vmatpush2.bf16.xpose.msra.mxu0 0
        %629 = vmatprep.subr.bf16.mxu0 0
        %630 = vmatpush2.bf16.xpose.msra.mxu0 0
        %631 = vmatprep.subr.bf16.mxu0 0
        %632 = vmatpush2.bf16.xpose.msra.mxu0 0
        %633 = vmatprep.subr.bf16.mxu0 0
        %634 = vmatpush2.bf16.xpose.msra.mxu0 0
        %635 = vmatprep.subr.bf16.mxu0 0
        %636 = vmatpush2.bf16.xpose.msra.mxu0 0
        %637 = vmatprep.subr.bf16.mxu0 0
        %638 = vmatpush2.bf16.xpose.msra.mxu0 0
        %639 = vmatprep.subr.bf16.mxu0 0
        %640 = vmatpush2.bf16.xpose.msra.mxu0 0
        %641 = vmatprep.mubr.bf16.mxu0 0
        %642 = vmatmul.mubr.bf16.gmra.mxu0 %v604
        %v643 = vpop.f32.mrf.mxu0
        %v644 = vadd.f32 0.0, %v643
        %v645 = vpop.f32.mrf.mxu0
        %v646 = vpop.f32.mrf.mxu0
        %v647 = vadd.f32 0.0, %v646
        %v648 = vpop.f32.mrf.mxu0
        %649 = vdwg.mxu0
        %v650 = vsel %vm452, %v644, -inf
        %v651 = vsel %vm453, %v647, -inf
        %v652 = vsel %vm458, %v650, -inf
        %653 = vmax.xlane.f32.xlu0 %v652
        %v654 = vpop.xlane.xlu0 %653
        %v655 = vsel %vm458, %v651, -inf
        %656 = vmax.xlane.f32.xlu0 %v655
        %v657 = vpop.xlane.xlu0 %656
        %v658 = vsel %vm465, %v654, 0.0
        %v659 = vsel %vm466, %v657, 0.0
        %v660 = vsub.f32 %v650, %v658
        %v661 = vsub.f32 %v651, %v659
        %v662 = vmul.f32 %v660, 1.442695
        %v663 = vpow.pop %v662
        %v664 = vmul.f32 %v661, 1.442695
        %v665 = vpow.pop %v664
        %v666 = vsel %vm458, %v663, 0.0
        %667 = vadd.xlane.f32.xlu0 %v666
        %v668 = vpop.xlane.xlu0 %667
        %v669 = vsel %vm458, %v665, 0.0
        %670 = vadd.xlane.f32.xlu0 %v669
        %v671 = vpop.xlane.xlu0 %670
        %vm672 = vcmp.gt.f32.partialorder %v668, 0.0
        %vm673 = vcmp.gt.f32.partialorder %v671, 0.0
        %v674 = vsel %vm672, %v668, 1.0
        %v675 = vsel %vm673, %v671, 1.0
        %v676 = vrcp.pop %v674
        %v677 = vrcp.pop %v675
        %v678 = vmul.f32 %v663, %v676
        %v679 = vmul.f32 %v665, %v677
        %v680 = vpack.c.bf16 %v679, %v678
        %681 = vrot.lane.b32.xlu0 %v467, 56
        %v682 = vpop.permute.xlu0 %681
        %v685 = vsel %vm458, %v680, 0
        %687 = vmatprep.subr.bf16.mxu0 0
        %688 = vmatpush1.bf16.msra.mxu0 0
        %689 = vmatprep.subr.bf16.mxu0 0
        %690 = vmatpush1.bf16.msra.mxu0 0
        %691 = vmatprep.subr.bf16.mxu0 0
        %692 = vmatpush1.bf16.msra.mxu0 0
        %693 = vmatprep.subr.bf16.mxu0 0
        %694 = vmatpush1.bf16.msra.mxu0 0
        %695 = vmatprep.subr.bf16.mxu0 0
        %696 = vmatpush1.bf16.msra.mxu0 0
        %697 = vmatprep.subr.bf16.mxu0 0
        %698 = vmatpush1.bf16.msra.mxu0 0
        %699 = vmatprep.subr.bf16.mxu0 0
        %700 = vmatpush1.bf16.msra.mxu0 0
        %701 = vmatprep.subr.bf16.mxu0 0
        %702 = vmatpush1.bf16.msra.mxu0 %v682
        %703 = vmatprep.subr.bf16.mxu0 0
        %704 = vmatpush2.bf16.msra.mxu0 0
        %705 = vmatprep.subr.bf16.mxu0 0
        %706 = vmatpush2.bf16.msra.mxu0 0
        %707 = vmatprep.subr.bf16.mxu0 0
        %708 = vmatpush2.bf16.msra.mxu0 0
        %709 = vmatprep.subr.bf16.mxu0 0
        %710 = vmatpush2.bf16.msra.mxu0 0
        %711 = vmatprep.subr.bf16.mxu0 0
        %712 = vmatpush2.bf16.msra.mxu0 0
        %713 = vmatprep.subr.bf16.mxu0 0
        %714 = vmatpush2.bf16.msra.mxu0 0
        %715 = vmatprep.subr.bf16.mxu0 0
        %716 = vmatpush2.bf16.msra.mxu0 0
        %717 = vmatprep.subr.bf16.mxu0 0
        %718 = vmatpush2.bf16.msra.mxu0 0
        %719 = vmatprep.mubr.bf16.mxu0 0
        %720 = vmatmul.mubr.bf16.gmra.mxu0 %v685
        %v721 = vpop.f32.mrf.mxu0
        %v722 = vadd.f32 0.0, %v721
        %v723 = vpop.f32.mrf.mxu0
        %v724 = vpop.f32.mrf.mxu0
        %v725 = vadd.f32 0.0, %v724
        %v726 = vpop.f32.mrf.mxu0
        %727 = vdwg.mxu0
        %730 = vrot.lane.b32.xlu0 %v722, 8
        %v731 = vpop.permute.xlu0 %730
        %732 = vrot.lane.b32.xlu0 %v725, 8
        %v733 = vpop.permute.xlu0 %732
        %vm736 = vcmask 130112
        %737 = vst.msk [vmem:[#allocation2] sm:$0xff] %vm736, %v731
        %738 = vst.msk [vmem:[#allocation2 + $0x8] sm:$0xff] %vm736, %v733
        %739 = vrot.lane.b32.xlu0 %v467, 112
        %v740 = vpop.permute.xlu0 %739
        %741 = vrot.lane.b32.xlu0 %v467, 80
        %v742 = vpop.permute.xlu0 %741
        %v744 = vsel %vm471, %v740, 0
        %v747 = vsel %vm471, %v742, 0
        %749 = vmatprep.subr.bf16.mxu0 0
        %750 = vmatpush1.bf16.xpose.msra.mxu0 0
        %751 = vmatprep.subr.bf16.mxu0 0
        %752 = vmatpush1.bf16.xpose.msra.mxu0 0
        %753 = vmatprep.subr.bf16.mxu0 0
        %754 = vmatpush1.bf16.xpose.msra.mxu0 0
        %755 = vmatprep.subr.bf16.mxu0 0
        %756 = vmatpush1.bf16.xpose.msra.mxu0 0
        %757 = vmatprep.subr.bf16.mxu0 0
        %758 = vmatpush1.bf16.xpose.msra.mxu0 0
        %759 = vmatprep.subr.bf16.mxu0 0
        %760 = vmatpush1.bf16.xpose.msra.mxu0 0
        %761 = vmatprep.subr.bf16.mxu0 0
        %762 = vmatpush1.bf16.xpose.msra.mxu0 0
        %763 = vmatprep.subr.bf16.mxu0 0
        %764 = vmatpush1.bf16.xpose.msra.mxu0 %v747
        %765 = vmatprep.subr.bf16.mxu0 0
        %766 = vmatpush2.bf16.xpose.msra.mxu0 0
        %767 = vmatprep.subr.bf16.mxu0 0
        %768 = vmatpush2.bf16.xpose.msra.mxu0 0
        %769 = vmatprep.subr.bf16.mxu0 0
        %770 = vmatpush2.bf16.xpose.msra.mxu0 0
        %771 = vmatprep.subr.bf16.mxu0 0
        %772 = vmatpush2.bf16.xpose.msra.mxu0 0
        %773 = vmatprep.subr.bf16.mxu0 0
        %774 = vmatpush2.bf16.xpose.msra.mxu0 0
        %775 = vmatprep.subr.bf16.mxu0 0
        %776 = vmatpush2.bf16.xpose.msra.mxu0 0
        %777 = vmatprep.subr.bf16.mxu0 0
        %778 = vmatpush2.bf16.xpose.msra.mxu0 0
        %779 = vmatprep.subr.bf16.mxu0 0
        %780 = vmatpush2.bf16.xpose.msra.mxu0 0
        %781 = vmatprep.mubr.bf16.mxu0 0
        %782 = vmatmul.mubr.bf16.gmra.mxu0 %v744
        %v783 = vpop.f32.mrf.mxu0
        %v784 = vadd.f32 0.0, %v783
        %v785 = vpop.f32.mrf.mxu0
        %v786 = vpop.f32.mrf.mxu0
        %v787 = vadd.f32 0.0, %v786
        %v788 = vpop.f32.mrf.mxu0
        %789 = vdwg.mxu0
        %v790 = vsel %vm452, %v784, -inf
        %v791 = vsel %vm453, %v787, -inf
        %v792 = vsel %vm458, %v790, -inf
        %793 = vmax.xlane.f32.xlu0 %v792
        %v794 = vpop.xlane.xlu0 %793
        %v795 = vsel %vm458, %v791, -inf
        %796 = vmax.xlane.f32.xlu0 %v795
        %v797 = vpop.xlane.xlu0 %796
        %v798 = vsel %vm465, %v794, 0.0
        %v799 = vsel %vm466, %v797, 0.0
        %v800 = vsub.f32 %v790, %v798
        %v801 = vsub.f32 %v791, %v799
        %v802 = vmul.f32 %v800, 1.442695
        %v803 = vpow.pop %v802
        %v804 = vmul.f32 %v801, 1.442695
        %v805 = vpow.pop %v804
        %v806 = vsel %vm458, %v803, 0.0
        %807 = vadd.xlane.f32.xlu0 %v806
        %v808 = vpop.xlane.xlu0 %807
        %v809 = vsel %vm458, %v805, 0.0
        %810 = vadd.xlane.f32.xlu0 %v809
        %v811 = vpop.xlane.xlu0 %810
        %vm812 = vcmp.gt.f32.partialorder %v808, 0.0
        %vm813 = vcmp.gt.f32.partialorder %v811, 0.0
        %v814 = vsel %vm812, %v808, 1.0
        %v815 = vsel %vm813, %v811, 1.0
        %v816 = vrcp.pop %v814
        %v817 = vrcp.pop %v815
        %v818 = vmul.f32 %v803, %v816
        %v819 = vmul.f32 %v805, %v817
        %v820 = vpack.c.bf16 %v819, %v818
        %821 = vrot.lane.b32.xlu0 %v467, 48
        %v822 = vpop.permute.xlu0 %821
        %v825 = vsel %vm458, %v820, 0
        %827 = vmatprep.subr.bf16.mxu0 0
        %828 = vmatpush1.bf16.msra.mxu0 0
        %829 = vmatprep.subr.bf16.mxu0 0
        %830 = vmatpush1.bf16.msra.mxu0 0
        %831 = vmatprep.subr.bf16.mxu0 0
        %832 = vmatpush1.bf16.msra.mxu0 0
        %833 = vmatprep.subr.bf16.mxu0 0
        %834 = vmatpush1.bf16.msra.mxu0 0
        %835 = vmatprep.subr.bf16.mxu0 0
        %836 = vmatpush1.bf16.msra.mxu0 0
        %837 = vmatprep.subr.bf16.mxu0 0
        %838 = vmatpush1.bf16.msra.mxu0 0
        %839 = vmatprep.subr.bf16.mxu0 0
        %840 = vmatpush1.bf16.msra.mxu0 0
        %841 = vmatprep.subr.bf16.mxu0 0
        %842 = vmatpush1.bf16.msra.mxu0 %v822
        %843 = vmatprep.subr.bf16.mxu0 0
        %844 = vmatpush2.bf16.msra.mxu0 0
        %845 = vmatprep.subr.bf16.mxu0 0
        %846 = vmatpush2.bf16.msra.mxu0 0
        %847 = vmatprep.subr.bf16.mxu0 0
        %848 = vmatpush2.bf16.msra.mxu0 0
        %849 = vmatprep.subr.bf16.mxu0 0
        %850 = vmatpush2.bf16.msra.mxu0 0
        %851 = vmatprep.subr.bf16.mxu0 0
        %852 = vmatpush2.bf16.msra.mxu0 0
        %853 = vmatprep.subr.bf16.mxu0 0
        %854 = vmatpush2.bf16.msra.mxu0 0
        %855 = vmatprep.subr.bf16.mxu0 0
        %856 = vmatpush2.bf16.msra.mxu0 0
        %857 = vmatprep.subr.bf16.mxu0 0
        %858 = vmatpush2.bf16.msra.mxu0 0
        %859 = vmatprep.mubr.bf16.mxu0 0
        %860 = vmatmul.mubr.bf16.gmra.mxu0 %v825
        %v861 = vpop.f32.mrf.mxu0
        %v862 = vadd.f32 0.0, %v861
        %v863 = vpop.f32.mrf.mxu0
        %v864 = vpop.f32.mrf.mxu0
        %v865 = vadd.f32 0.0, %v864
        %v866 = vpop.f32.mrf.mxu0
        %867 = vdwg.mxu0
        %870 = vrot.lane.b32.xlu0 %v862, 16
        %v871 = vpop.permute.xlu0 %870
        %872 = vrot.lane.b32.xlu0 %v865, 16
        %v873 = vpop.permute.xlu0 %872
        %vm876 = vcmask 195712
        %877 = vst.msk [vmem:[#allocation2] sm:$0xff] %vm876, %v871
        %878 = vst.msk [vmem:[#allocation2 + $0x8] sm:$0xff] %vm876, %v873
        %879 = vrot.lane.b32.xlu0 %v467, 104
        %v880 = vpop.permute.xlu0 %879
        %881 = vrot.lane.b32.xlu0 %v467, 72
        %v882 = vpop.permute.xlu0 %881
        %v884 = vsel %vm471, %v880, 0
        %v887 = vsel %vm471, %v882, 0
        %889 = vmatprep.subr.bf16.mxu0 0
        %890 = vmatpush1.bf16.xpose.msra.mxu0 0
        %891 = vmatprep.subr.bf16.mxu0 0
        %892 = vmatpush1.bf16.xpose.msra.mxu0 0
        %893 = vmatprep.subr.bf16.mxu0 0
        %894 = vmatpush1.bf16.xpose.msra.mxu0 0
        %895 = vmatprep.subr.bf16.mxu0 0
        %896 = vmatpush1.bf16.xpose.msra.mxu0 0
        %897 = vmatprep.subr.bf16.mxu0 0
        %898 = vmatpush1.bf16.xpose.msra.mxu0 0
        %899 = vmatprep.subr.bf16.mxu0 0
        %900 = vmatpush1.bf16.xpose.msra.mxu0 0
        %901 = vmatprep.subr.bf16.mxu0 0
        %902 = vmatpush1.bf16.xpose.msra.mxu0 0
        %903 = vmatprep.subr.bf16.mxu0 0
        %904 = vmatpush1.bf16.xpose.msra.mxu0 %v887
        %905 = vmatprep.subr.bf16.mxu0 0
        %906 = vmatpush2.bf16.xpose.msra.mxu0 0
        %907 = vmatprep.subr.bf16.mxu0 0
        %908 = vmatpush2.bf16.xpose.msra.mxu0 0
        %909 = vmatprep.subr.bf16.mxu0 0
        %910 = vmatpush2.bf16.xpose.msra.mxu0 0
        %911 = vmatprep.subr.bf16.mxu0 0
        %912 = vmatpush2.bf16.xpose.msra.mxu0 0
        %913 = vmatprep.subr.bf16.mxu0 0
        %914 = vmatpush2.bf16.xpose.msra.mxu0 0
        %915 = vmatprep.subr.bf16.mxu0 0
        %916 = vmatpush2.bf16.xpose.msra.mxu0 0
        %917 = vmatprep.subr.bf16.mxu0 0
        %918 = vmatpush2.bf16.xpose.msra.mxu0 0
        %919 = vmatprep.subr.bf16.mxu0 0
        %920 = vmatpush2.bf16.xpose.msra.mxu0 0
        %921 = vmatprep.mubr.bf16.mxu0 0
        %922 = vmatmul.mubr.bf16.gmra.mxu0 %v884
        %v923 = vpop.f32.mrf.mxu0
        %v924 = vadd.f32 0.0, %v923
        %v925 = vpop.f32.mrf.mxu0
        %v926 = vpop.f32.mrf.mxu0
        %v927 = vadd.f32 0.0, %v926
        %v928 = vpop.f32.mrf.mxu0
        %929 = vdwg.mxu0
        %v930 = vsel %vm452, %v924, -inf
        %v931 = vsel %vm453, %v927, -inf
        %v932 = vsel %vm458, %v930, -inf
        %933 = vmax.xlane.f32.xlu0 %v932
        %v934 = vpop.xlane.xlu0 %933
        %v935 = vsel %vm458, %v931, -inf
        %936 = vmax.xlane.f32.xlu0 %v935
        %v937 = vpop.xlane.xlu0 %936
        %v938 = vsel %vm465, %v934, 0.0
        %v939 = vsel %vm466, %v937, 0.0
        %v940 = vsub.f32 %v930, %v938
        %v941 = vsub.f32 %v931, %v939
        %v942 = vmul.f32 %v940, 1.442695
        %v943 = vpow.pop %v942
        %v944 = vmul.f32 %v941, 1.442695
        %v945 = vpow.pop %v944
        %v946 = vsel %vm458, %v943, 0.0
        %947 = vadd.xlane.f32.xlu0 %v946
        %v948 = vpop.xlane.xlu0 %947
        %v949 = vsel %vm458, %v945, 0.0
        %950 = vadd.xlane.f32.xlu0 %v949
        %v951 = vpop.xlane.xlu0 %950
        %vm952 = vcmp.gt.f32.partialorder %v948, 0.0
        %vm953 = vcmp.gt.f32.partialorder %v951, 0.0
        %v954 = vsel %vm952, %v948, 1.0
        %v955 = vsel %vm953, %v951, 1.0
        %v956 = vrcp.pop %v954
        %v957 = vrcp.pop %v955
        %v958 = vmul.f32 %v943, %v956
        %v959 = vmul.f32 %v945, %v957
        %v960 = vpack.c.bf16 %v959, %v958
        %961 = vrot.lane.b32.xlu0 %v467, 40
        %v962 = vpop.permute.xlu0 %961
        %v965 = vsel %vm458, %v960, 0
        %967 = vmatprep.subr.bf16.mxu0 0
        %968 = vmatpush1.bf16.msra.mxu0 0
        %969 = vmatprep.subr.bf16.mxu0 0
        %970 = vmatpush1.bf16.msra.mxu0 0
        %971 = vmatprep.subr.bf16.mxu0 0
        %972 = vmatpush1.bf16.msra.mxu0 0
        %973 = vmatprep.subr.bf16.mxu0 0
        %974 = vmatpush1.bf16.msra.mxu0 0
        %975 = vmatprep.subr.bf16.mxu0 0
        %976 = vmatpush1.bf16.msra.mxu0 0
        %977 = vmatprep.subr.bf16.mxu0 0
        %978 = vmatpush1.bf16.msra.mxu0 0
        %979 = vmatprep.subr.bf16.mxu0 0
        %980 = vmatpush1.bf16.msra.mxu0 0
        %981 = vmatprep.subr.bf16.mxu0 0
        %982 = vmatpush1.bf16.msra.mxu0 %v962
        %983 = vmatprep.subr.bf16.mxu0 0
        %984 = vmatpush2.bf16.msra.mxu0 0
        %985 = vmatprep.subr.bf16.mxu0 0
        %986 = vmatpush2.bf16.msra.mxu0 0
        %987 = vmatprep.subr.bf16.mxu0 0
        %988 = vmatpush2.bf16.msra.mxu0 0
        %989 = vmatprep.subr.bf16.mxu0 0
        %990 = vmatpush2.bf16.msra.mxu0 0
        %991 = vmatprep.subr.bf16.mxu0 0
        %992 = vmatpush2.bf16.msra.mxu0 0
        %993 = vmatprep.subr.bf16.mxu0 0
        %994 = vmatpush2.bf16.msra.mxu0 0
        %995 = vmatprep.subr.bf16.mxu0 0
        %996 = vmatpush2.bf16.msra.mxu0 0
        %997 = vmatprep.subr.bf16.mxu0 0
        %998 = vmatpush2.bf16.msra.mxu0 0
        %999 = vmatprep.mubr.bf16.mxu0 0
        %1000 = vmatmul.mubr.bf16.gmra.mxu0 %v965
        %v1001 = vpop.f32.mrf.mxu0
        %v1002 = vadd.f32 0.0, %v1001
        %v1003 = vpop.f32.mrf.mxu0
        %v1004 = vpop.f32.mrf.mxu0
        %v1005 = vadd.f32 0.0, %v1004
        %v1006 = vpop.f32.mrf.mxu0
        %1007 = vdwg.mxu0
        %1010 = vrot.lane.b32.xlu0 %v1002, 24
        %v1011 = vpop.permute.xlu0 %1010
        %1012 = vrot.lane.b32.xlu0 %v1005, 24
        %v1013 = vpop.permute.xlu0 %1012
        %vm1016 = vcmask 261312
        %1017 = vst.msk [vmem:[#allocation2] sm:$0xff] %vm1016, %v1011
        %1018 = vst.msk [vmem:[#allocation2 + $0x8] sm:$0xff] %vm1016, %v1013
        %v1019 = vld [vmem:[#allocation2] sm:$0xff]
        %v1020 = vld [vmem:[#allocation2 + $0x8] sm:$0xff]
        %v1021 = vpack.c.bf16 %v1020, %v1019
        %v1022 = vld [vmem:[#allocation9] sm:$0xf]
        %v1023 = vld [vmem:[#allocation9 + $0x4] sm:$0xf]
        %v1024 = vld [vmem:[#allocation9 + $0x8] sm:$0xf]
        %v1025 = vld [vmem:[#allocation9 + $0xc] sm:$0xf]
        %v1026 = vld [vmem:[%s5] sm:$0x1]
        %v1028 = vlaneseq
        %v1029 = vshrl.u32 %v1028, 7
        %v1030 = vsub.s32 0, %v1029
        %v1031 = vrot.slane %v1026, %v1030
        %v1037 = vunpack.c.l.b16 %v1022
        %v1038 = vunpack.c.l.b16 %v1023
        %v1039 = vunpack.c.l.b16 %v1024
        %v1040 = vunpack.c.l.b16 %v1025
        %v1041 = vpack.c.b16 %v1038, %v1037
        %v1042 = vpack.c.b16 %v1040, %v1039
        %v1046 = vsel %vm364, %v1021, 0
        %1048 = vmatprep.subr.bf16.mxu0 0
        %1049 = vmatpush1.bf16.msra.mxu0 0
        %1050 = vmatprep.subr.bf16.mxu0 0
        %1051 = vmatpush1.bf16.msra.mxu0 0
        %1052 = vmatprep.subr.bf16.mxu0 0
        %1053 = vmatpush1.bf16.msra.mxu0 0
        %1054 = vmatprep.subr.bf16.mxu0 0
        %1055 = vmatpush1.bf16.msra.mxu0 0
        %1056 = vmatprep.subr.bf16.mxu0 0
        %1057 = vmatpush1.bf16.msra.mxu0 0
        %1058 = vmatprep.subr.bf16.mxu0 0
        %1059 = vmatpush1.bf16.msra.mxu0 0
        %1060 = vmatprep.subr.bf16.mxu0 0
        %1061 = vmatpush1.bf16.msra.mxu0 %v1042
        %1062 = vmatprep.subr.bf16.mxu0 0
        %1063 = vmatpush1.bf16.msra.mxu0 %v1041
        %1064 = vmatprep.subr.bf16.mxu0 0
        %1065 = vmatpush2.bf16.msra.mxu0 0
        %1066 = vmatprep.subr.bf16.mxu0 0
        %1067 = vmatpush2.bf16.msra.mxu0 0
        %1068 = vmatprep.subr.bf16.mxu0 0
        %1069 = vmatpush2.bf16.msra.mxu0 0
        %1070 = vmatprep.subr.bf16.mxu0 0
        %1071 = vmatpush2.bf16.msra.mxu0 0
        %1072 = vmatprep.subr.bf16.mxu0 0
        %1073 = vmatpush2.bf16.msra.mxu0 0
        %1074 = vmatprep.subr.bf16.mxu0 0
        %1075 = vmatpush2.bf16.msra.mxu0 0
        %1076 = vmatprep.subr.bf16.mxu0 0
        %1077 = vmatpush2.bf16.msra.mxu0 0
        %1078 = vmatprep.subr.bf16.mxu0 0
        %1079 = vmatpush2.bf16.msra.mxu0 0
        %1080 = vmatprep.mubr.bf16.mxu0 0
        %1081 = vmatmul.mubr.bf16.gmra.mxu0 %v1046
        %v1082 = vpop.f32.mrf.mxu0
        %v1083 = vadd.f32 %v1031, %v1082
        %v1084 = vpop.f32.mrf.mxu0
        %v1085 = vpop.f32.mrf.mxu0
        %v1086 = vadd.f32 %v1031, %v1085
        %v1087 = vpop.f32.mrf.mxu0
        %1088 = vdwg.mxu0
        %1089 = vst.msk [vmem:[%s332] sm:$0xff] %vm364, %v1083
        %1090 = vst.msk [vmem:[%s332 + $0x8] sm:$0xff] %vm364, %v1086
        %s1091 = sand.u32 %s171, 1
        %s1092 = scalar_lea.sflag [#allocation5], %s1091
        %s1093 = sand.u32 %s171, 1
        %s1094 = smul.addr %s1093, 16
        %s1095 = scalar_lea.vmem [#allocation11], %s1094
        // Predicated region
        $region61: #{tpu_custom_call.1} parent=43 // pred_check
          %p1096 = pneg %p181
        $region62: #{tpu_custom_call.1} parent=43 // pred_check_branch
          %1098 = sbr.rel (%p1096) target = $region64
        $region63: #{tpu_custom_call.1} parent=43 // pred_region
          %s1100 = ssub.s32 256, 256
          %1101 = vsyncadd %s1092, %s1100
          %s1102 = smul.addr %s27, 2
          %s1103 = smul.addr %s1102, 128
          %s1104 = scalar_lea.hbm %s6, %s1103
          %s1105 = sshll.u32 %s1095, 4
          %s1106 = int_to_ptr.vmem [resolvable:$true] %s1105
          %1111 = dma.vmem_to_hbm [thread:$0]  %s1106, 256, %s1104, %s1092, 128, 128, 8
        $region64: #{tpu_custom_call.1} parent=43 // pred_fallthru
          _
      $region44: #{tpu_custom_call.1} parent=5 // pred_fallthru
        _
      %p1112 = scmp.le.s32.totalorder 2, %s22
      // Predicated region
      $region65: #{tpu_custom_call.1} parent=5 // pred_check
        %p1113 = pneg %p1112
      $region66: #{tpu_custom_call.1} parent=5 // pred_check_branch
        %1115 = sbr.rel (%p1113) target = $region68
      $region67: #{tpu_custom_call.1} parent=5 // pred_region
        %s1116 = ssub.s32 %s22, 2
        // Predicated region
        $region69: #{tpu_custom_call.1} parent=67 // pred_check
          %p1117 = pneg %p187
        $region70: #{tpu_custom_call.1} parent=67 // pred_check_branch
          %1119 = sbr.rel (%p1117) target = $region72
        $region71: #{tpu_custom_call.1} parent=67 // pred_region
          %s1120 = sand.u32 %s172, 1
          %s1121 = scalar_lea.sflag [#allocation5], %s1120
          %s1122 = sand.u32 %s172, 1
          %s1123 = smul.addr %s1122, 16
          %s1124 = scalar_lea.vmem [#allocation11], %s1123
          %1125 = dma.done %s1121, 256
        $region72: #{tpu_custom_call.1} parent=67 // pred_fallthru
          _
      $region68: #{tpu_custom_call.1} parent=5 // pred_fallthru
        _
    $region6: #{tpu_custom_call.1} parent=1 // loop_footer
      %s26 = sadd.s32 1, %s22
    $region7: #{tpu_custom_call.1} parent=1 // loop_footer_branch
      %21 = sbr.rel target = $region3
    $region8: #{tpu_custom_call.1} parent=1 // loop_exit
      _
    %1126 = vsyncpa [#allocation4], 1
    %s1127 = scalar_lea.sflag [#allocation4], 1
    %1128 = vsyncpa %s1127, 1
    %1129 = vsyncpa [#allocation7], 1
    %s1130 = scalar_lea.sflag [#allocation7], 1
    %1131 = vsyncpa %s1130, 1
    %1132 = vsyncpa [#allocation10], 1
    %1133 = vsyncpa [#allocation5], 1
    %s1134 = scalar_lea.sflag [#allocation5], 1
    %1135 = vsyncpa %s1134, 1

</llo_original>
